<compile_context>
chip_gen: v7x
topology: tpu7x:2x2x1
jax: 0.10.0
libtpu: 0.0.40
codegen_flags: <defaults>
</compile_context>

<pallas_src>
import functools

import jax
import jax.numpy as jnp
from jax import lax
from jax.experimental import pallas as pl
from jax.experimental.pallas import tpu as pltpu


def _attention_kernel(x_ref, qw_ref, qb_ref, kw_ref, kb_ref, vw_ref, vb_ref,
                      pw_ref, pb_ref, o_ref, acc_ref, *, heads_per_group,
                      head_dim):
    """One (batch, head_group) step of fused MHSA.

    x_ref      : (1, N, C)          bf16
    qw/kw/vw   : (1, C, G*hd)       bf16   (group-fused, lane-dense)
    qb/kb/vb   : (1, 1, G*hd)       f32
    pw_ref     : (1, G*hd, C)       bf16   (group row-slab of proj weight)
    pb_ref     : (1, C)             f32
    o_ref      : (1, N, C)          out dtype
    acc_ref    : (N, C)             f32 VMEM scratch (output-proj accumulator)
    """
    g = pl.program_id(1)
    n_groups = pl.num_programs(1)

    @pl.when(g == 0)
    def _():
        acc_ref[...] = jnp.zeros_like(acc_ref)

    x = x_ref[0]                                            # (N, C) bf16

    # Group-fused projections: one matmul per Q/K/V with G*hd-wide outputs.
    # (Q weights/bias carry the attention scale, folded in the wrapper.)
    q = (jnp.dot(x, qw_ref[0], preferred_element_type=jnp.float32)
         + qb_ref[0]).astype(x.dtype)                       # (N, G*hd)
    k = (jnp.dot(x, kw_ref[0], preferred_element_type=jnp.float32)
         + kb_ref[0]).astype(x.dtype)                       # (N, G*hd)
    v = (jnp.dot(x, vw_ref[0], preferred_element_type=jnp.float32)
         + vb_ref[0]).astype(x.dtype)                       # (N, G*hd)

    # Per-head softmax(QK^T)V inside the group (G is small: 1-4 heads).
    outs = []
    for h in range(heads_per_group):
        sl = slice(h * head_dim, (h + 1) * head_dim)
        qh = q[:, sl]
        kh = k[:, sl]
        vh = v[:, sl]

        # Q @ K^T with the transpose folded into the contraction (no XLU).
        s = lax.dot_general(qh, kh, (((1,), (1,)), ((), ())),
                            preferred_element_type=jnp.float32)   # (N, N) f32

        # Numerically stable softmax (f32); approx reciprocal -> EUP slot.
        s = s - jnp.max(s, axis=-1, keepdims=True)
        p = jnp.exp(s)
        p = p * pl.reciprocal(jnp.sum(p, axis=-1, keepdims=True), approx=True)

        outs.append(jnp.dot(p.astype(x.dtype), vh,
                            preferred_element_type=jnp.float32))  # (N, hd)

    # One lane-dense (N, G*hd) @ (G*hd, C) fold of this whole group into the
    # output-projection accumulator (instead of per-head hd-wide matmuls).
    o_grp = jnp.concatenate(outs, axis=-1).astype(x.dtype)        # (N, G*hd)
    acc_ref[...] += jnp.dot(o_grp, pw_ref[0],
                            preferred_element_type=jnp.float32)   # (N, C)

    @pl.when(g == n_groups - 1)
    def _():
        o_ref[0] = (acc_ref[...] + pb_ref[...]).astype(o_ref.dtype)


def _pick_heads_per_group(num_heads, head_dim, lane_target=128):
    """Smallest divisor G of num_heads with G*head_dim >= lane_target, else
    all heads in one group (keeps MXU lane width dense at real ViT sizes and
    collapses tiny configs into a single group / grid step)."""
    g = num_heads
    for cand in range(1, num_heads + 1):
        if num_heads % cand:
            continue
        g = cand
        if cand * head_dim >= lane_target:
            break
    return g


def attention_forward(x, qkv_w, qkv_b, proj_w, proj_b, *, num_heads):
    """x: (B, N, C); qkv_w: (3C, C), proj_w: (C, C) in torch (out, in) layout."""
    B, N, C = x.shape
    hd = C // num_heads
    scale = hd ** (-0.5)
    compute_dtype = jnp.bfloat16

    G = _pick_heads_per_group(num_heads, hd)   # heads per group
    n_groups = num_heads // G
    gw = G * hd                                 # group lane width

    # --- Wrapper-side weight plumbing (layout only, no extra runtime math) ---
    w_t = qkv_w.T                               # (C, 3C): [q | k | v] columns,
    #                                             head-major within each block.
    q_w = w_t[:, 0 * C:1 * C].reshape(C, n_groups, gw).transpose(1, 0, 2)
    k_w = w_t[:, 1 * C:2 * C].reshape(C, n_groups, gw).transpose(1, 0, 2)
    v_w = w_t[:, 2 * C:3 * C].reshape(C, n_groups, gw).transpose(1, 0, 2)
    q_b = qkv_b[0 * C:1 * C].reshape(n_groups, 1, gw)
    k_b = qkv_b[1 * C:2 * C].reshape(n_groups, 1, gw)
    v_b = qkv_b[2 * C:3 * C].reshape(n_groups, 1, gw)
    p_w = proj_w.T.reshape(n_groups, gw, C)     # per-group row slabs, lane-dense
    p_b = proj_b.reshape(1, C)

    # Fold the attention scale into the Q projection (completely free).
    q_w = q_w * scale
    q_b = q_b * scale

    # bf16 MXU operands; biases stay f32 (accumulation / softmax are f32).
    x_c = x.astype(compute_dtype)
    q_w = q_w.astype(compute_dtype)
    k_w = k_w.astype(compute_dtype)
    v_w = v_w.astype(compute_dtype)
    p_w = p_w.astype(compute_dtype)
    q_b = q_b.astype(jnp.float32)
    k_b = k_b.astype(jnp.float32)
    v_b = v_b.astype(jnp.float32)
    p_b = p_b.astype(jnp.float32)

    kernel = functools.partial(_attention_kernel, heads_per_group=G,
                               head_dim=hd)

    # --- VMEM budget (double-buffered blocks + f32 accumulator) -------------
    out_itemsize = jnp.dtype(x.dtype).itemsize
    per_step_bytes = (
        2 * (N * C * 2)                       # x block (bf16), double buffered
        + 2 * (N * C * out_itemsize)          # out block, double buffered
        + 2 * (3 * C * gw + gw * C) * 2       # group q/k/v/proj weights (bf16)
        + 2 * (3 * gw + C) * 4                # biases (f32)
        + N * C * 4                           # f32 accumulator scratch
    )
    vmem_limit = int(min(max(4 * per_step_bytes, 32 * 1024 * 1024),
                         48 * 1024 * 1024))

    # --- Advisory cost estimate ----------------------------------------------
    weight_bytes = 4 * C * C * 2              # q/k/v/proj weights in bf16
    weight_fetches = B if n_groups > 1 else 1 # streamed per batch if grouped
    cost = pl.CostEstimate(
        flops=int(8 * B * N * C * C + 4 * B * N * N * C),
        transcendentals=int(B * num_heads * N * N),
        bytes_accessed=int(B * N * C * 2 + B * N * C * out_itemsize
                           + weight_fetches * weight_bytes + 4 * C * 4),
    )

    grp_map = lambda b, g: (g, 0, 0)          # per-group weights / biases

    return pl.pallas_call(
        kernel,
        out_shape=jax.ShapeDtypeStruct((B, N, C), x.dtype),
        grid_spec=pltpu.PrefetchScalarGridSpec(
            num_scalar_prefetch=0,
            grid=(B, n_groups),
            in_specs=[
                pl.BlockSpec((1, N, C), lambda b, g: (b, 0, 0)),   # x
                pl.BlockSpec((1, C, gw), grp_map),                 # q_w
                pl.BlockSpec((1, 1, gw), grp_map),                 # q_b
                pl.BlockSpec((1, C, gw), grp_map),                 # k_w
                pl.BlockSpec((1, 1, gw), grp_map),                 # k_b
                pl.BlockSpec((1, C, gw), grp_map),                 # v_w
                pl.BlockSpec((1, 1, gw), grp_map),                 # v_b
                pl.BlockSpec((1, gw, C), grp_map),                 # p_w
                pl.BlockSpec((1, C), lambda b, g: (0, 0)),         # p_b
            ],
            out_specs=pl.BlockSpec((1, N, C), lambda b, g: (b, 0, 0)),
            scratch_shapes=[pltpu.VMEM((N, C), jnp.float32)],
        ),
        compiler_params=pltpu.CompilerParams(
            dimension_semantics=("parallel", "arbitrary"),
            vmem_limit_bytes=vmem_limit),
        cost_estimate=cost,
    )(x_c, q_w, q_b, k_w, k_b, v_w, v_b, p_w, p_b)


def _reference(x, qkv_w, qkv_b, proj_w, proj_b, num_heads):
    """Pure f32 JAX reference matching the PyTorch module exactly."""
    B, N, C = x.shape
    hd = C // num_heads
    scale = hd ** (-0.5)
    qkv = jnp.einsum("bnc,oc->bno", x, qkv_w) + qkv_b
    qkv = qkv.reshape(B, N, 3, num_heads, hd).transpose(2, 0, 3, 1, 4)
    q, k, v = qkv[0], qkv[1], qkv[2]
    attn = jnp.einsum("bhqd,bhkd->bhqk", q, k) * scale
    attn = jax.nn.softmax(attn, axis=-1)
    out = jnp.einsum("bhqk,bhkd->bhqd", attn, v)
    out = out.transpose(0, 2, 1, 3).reshape(B, N, C)
    return jnp.einsum("bnc,oc->bno", out, proj_w) + proj_b


if __name__ == "__main__":
    B, N, C = 2, 8, 32
    num_heads = 4

    key = jax.random.PRNGKey(0)
    k_x, k_qw, k_qb, k_pw, k_pb = jax.random.split(key, 5)

    x = jax.random.normal(k_x, (B, N, C), dtype=jnp.float32)
    # Deterministic synthetic parameters (torch-style (out, in) weight layout).
    qkv_w = jax.random.normal(k_qw, (3 * C, C), dtype=jnp.float32) * 0.02
    qkv_b = jax.random.normal(k_qb, (3 * C,), dtype=jnp.float32) * 0.02
    proj_w = jax.random.normal(k_pw, (C, C), dtype=jnp.float32) * 0.02
    proj_b = jax.random.normal(k_pb, (C,), dtype=jnp.float32) * 0.02

    out = attention_forward(x, qkv_w, qkv_b, proj_w, proj_b, num_heads=num_heads)
    out = jax.block_until_ready(out)

    ref = _reference(x, qkv_w, qkv_b, proj_w, proj_b, num_heads)
    assert out.shape == (B, N, C)
    # bf16 MXU operands + approx reciprocal -> loosened tolerance vs f32 ref.
    assert jnp.allclose(out, ref, atol=1e-2, rtol=1e-2), "mismatch vs reference"

    print("KERNEL_OK")
</pallas_src>

<mosaic_0001>
module attributes {stable_mosaic.version = 11 : i64} {
  func.func @_attention_kernel(%arg0: i32, %arg1: i32, %arg2: memref<1x8x32xbf16, #tpu.memory_space<vmem>>, %arg3: memref<1x32x32xbf16, #tpu.memory_space<vmem>>, %arg4: memref<1x1x32xf32, #tpu.memory_space<vmem>>, %arg5: memref<1x32x32xbf16, #tpu.memory_space<vmem>>, %arg6: memref<1x1x32xf32, #tpu.memory_space<vmem>>, %arg7: memref<1x32x32xbf16, #tpu.memory_space<vmem>>, %arg8: memref<1x1x32xf32, #tpu.memory_space<vmem>>, %arg9: memref<1x32x32xbf16, #tpu.memory_space<vmem>>, %arg10: memref<1x32xf32, #tpu.memory_space<vmem>>, %arg11: memref<1x8x32xf32, #tpu.memory_space<vmem>>, %arg12: memref<8x32xf32, #tpu.memory_space<vmem>>) attributes {dimension_semantics = [#tpu.dimension_semantics<parallel>, #tpu.dimension_semantics<arbitrary>], iteration_bounds = array<i64: 2, 1>, scalar_prefetch = 0 : i64, scratch_operands = 1 : i64, tpu.core_type = #tpu.core_type<tc>, window_params = [{transform_indices = @transform_0, window_bounds = array<i64: 1, 8, 32>}, {transform_indices = @transform_1, window_bounds = array<i64: 1, 32, 32>}, {transform_indices = @transform_2, window_bounds = array<i64: 1, 1, 32>}, {transform_indices = @transform_3, window_bounds = array<i64: 1, 32, 32>}, {transform_indices = @transform_4, window_bounds = array<i64: 1, 1, 32>}, {transform_indices = @transform_5, window_bounds = array<i64: 1, 32, 32>}, {transform_indices = @transform_6, window_bounds = array<i64: 1, 1, 32>}, {transform_indices = @transform_7, window_bounds = array<i64: 1, 32, 32>}, {pipeline_mode = #tpu.pipeline_mode<synchronous>, transform_indices = @transform_8, window_bounds = array<i64: 1, 32>}, {transform_indices = @transform_9, window_bounds = array<i64: 1, 8, 32>}]} {
    %c0_i32 = arith.constant 0 : i32
    %0 = arith.cmpi eq, %arg1, %c0_i32 : i32
    %1 = arith.extui %0 : i1 to i32
    %c0_i32_0 = arith.constant 0 : i32
    %2 = arith.cmpi ne, %1, %c0_i32_0 : i32
    scf.if %2 {
      %cst_49 = arith.constant 0.000000e+00 : f32
      %104 = vector.broadcast %cst_49 : f32 to vector<8x32xf32>
      %c0_50 = arith.constant 0 : index
      %c0_51 = arith.constant 0 : index
      %105 = vector.load %arg12[%c0_50, %c0_51] : memref<8x32xf32, #tpu.memory_space<vmem>>, vector<8x32xf32>
      tpu.vector_store %arg12[%c0_50, %c0_51], %104 {strides = array<i32>} : memref<8x32xf32, #tpu.memory_space<vmem>>, vector<8x32xf32>,
    } else {
    }
    %c0 = arith.constant 0 : index
    %c0_1 = arith.constant 0 : index
    %c0_2 = arith.constant 0 : index
    %3 = vector.load %arg2[%c0, %c0_1, %c0_2] : memref<1x8x32xbf16, #tpu.memory_space<vmem>>, vector<1x8x32xbf16>
    %4 = vector.shape_cast %3 : vector<1x8x32xbf16> to vector<8x32xbf16>
    %c0_3 = arith.constant 0 : index
    %c0_4 = arith.constant 0 : index
    %c0_5 = arith.constant 0 : index
    %5 = vector.load %arg3[%c0_3, %c0_4, %c0_5] : memref<1x32x32xbf16, #tpu.memory_space<vmem>>, vector<1x32x32xbf16>
    %6 = vector.shape_cast %5 : vector<1x32x32xbf16> to vector<32x32xbf16>
    %cst = arith.constant dense<0.000000e+00> : vector<8x32xf32>
    %7 = tpu.matmul %4, %6, %cst {dimension_numbers = #tpu.dot_dimension_numbers<[1], [0], [0], [1], [0, 0, 1, 1], [], []>} : vector<8x32xbf16>, vector<32x32xbf16>, vector<8x32xf32> -> vector<8x32xf32>
    %c0_6 = arith.constant 0 : index
    %c0_7 = arith.constant 0 : index
    %c0_8 = arith.constant 0 : index
    %8 = vector.load %arg4[%c0_6, %c0_7, %c0_8] : memref<1x1x32xf32, #tpu.memory_space<vmem>>, vector<1x1x32xf32>
    %9 = vector.shape_cast %8 : vector<1x1x32xf32> to vector<1x32xf32>
    %10 = vector.broadcast %9 : vector<1x32xf32> to vector<8x32xf32>
    %11 = arith.addf %7, %10 : vector<8x32xf32>
    %12 = arith.truncf %11 : vector<8x32xf32> to vector<8x32xbf16>
    %c0_9 = arith.constant 0 : index
    %c0_10 = arith.constant 0 : index
    %c0_11 = arith.constant 0 : index
    %13 = vector.load %arg5[%c0_9, %c0_10, %c0_11] : memref<1x32x32xbf16, #tpu.memory_space<vmem>>, vector<1x32x32xbf16>
    %14 = vector.shape_cast %13 : vector<1x32x32xbf16> to vector<32x32xbf16>
    %cst_12 = arith.constant dense<0.000000e+00> : vector<8x32xf32>
    %15 = tpu.matmul %4, %14, %cst_12 {dimension_numbers = #tpu.dot_dimension_numbers<[1], [0], [0], [1], [0, 0, 1, 1], [], []>} : vector<8x32xbf16>, vector<32x32xbf16>, vector<8x32xf32> -> vector<8x32xf32>
    %c0_13 = arith.constant 0 : index
    %c0_14 = arith.constant 0 : index
    %c0_15 = arith.constant 0 : index
    %16 = vector.load %arg6[%c0_13, %c0_14, %c0_15] : memref<1x1x32xf32, #tpu.memory_space<vmem>>, vector<1x1x32xf32>
    %17 = vector.shape_cast %16 : vector<1x1x32xf32> to vector<1x32xf32>
    %18 = vector.broadcast %17 : vector<1x32xf32> to vector<8x32xf32>
    %19 = arith.addf %15, %18 : vector<8x32xf32>
    %20 = arith.truncf %19 : vector<8x32xf32> to vector<8x32xbf16>
    %c0_16 = arith.constant 0 : index
    %c0_17 = arith.constant 0 : index
    %c0_18 = arith.constant 0 : index
    %21 = vector.load %arg7[%c0_16, %c0_17, %c0_18] : memref<1x32x32xbf16, #tpu.memory_space<vmem>>, vector<1x32x32xbf16>
    %22 = vector.shape_cast %21 : vector<1x32x32xbf16> to vector<32x32xbf16>
    %cst_19 = arith.constant dense<0.000000e+00> : vector<8x32xf32>
    %23 = tpu.matmul %4, %22, %cst_19 {dimension_numbers = #tpu.dot_dimension_numbers<[1], [0], [0], [1], [0, 0, 1, 1], [], []>} : vector<8x32xbf16>, vector<32x32xbf16>, vector<8x32xf32> -> vector<8x32xf32>
    %c0_20 = arith.constant 0 : index
    %c0_21 = arith.constant 0 : index
    %c0_22 = arith.constant 0 : index
    %24 = vector.load %arg8[%c0_20, %c0_21, %c0_22] : memref<1x1x32xf32, #tpu.memory_space<vmem>>, vector<1x1x32xf32>
    %25 = vector.shape_cast %24 : vector<1x1x32xf32> to vector<1x32xf32>
    %26 = vector.broadcast %25 : vector<1x32xf32> to vector<8x32xf32>
    %27 = arith.addf %23, %26 : vector<8x32xf32>
    %28 = arith.truncf %27 : vector<8x32xf32> to vector<8x32xbf16>
    %29 = vector.extract_strided_slice %12 {offsets = [0, 0], sizes = [8, 8], strides = [1, 1]} : vector<8x32xbf16> to vector<8x8xbf16>
    %30 = vector.extract_strided_slice %20 {offsets = [0, 0], sizes = [8, 8], strides = [1, 1]} : vector<8x32xbf16> to vector<8x8xbf16>
    %31 = vector.extract_strided_slice %28 {offsets = [0, 0], sizes = [8, 8], strides = [1, 1]} : vector<8x32xbf16> to vector<8x8xbf16>
    %cst_23 = arith.constant dense<0.000000e+00> : vector<8x8xf32>
    %32 = tpu.matmul %29, %30, %cst_23 {dimension_numbers = #tpu.dot_dimension_numbers<[1], [1], [0], [0], [0, 0, 1, 0], [], []>} : vector<8x8xbf16>, vector<8x8xbf16>, vector<8x8xf32> -> vector<8x8xf32>
    %cst_24 = arith.constant dense<0xFF800000> : vector<8xf32>
    %33 = vector.multi_reduction <maximumf>, %32, %cst_24 [1] : vector<8x8xf32> to vector<8xf32>
    %34 = vector.shape_cast %33 : vector<8xf32> to vector<8x1xf32>
    %35 = vector.broadcast %34 : vector<8x1xf32> to vector<8x8xf32>
    %36 = arith.subf %32, %35 : vector<8x8xf32>
    %37 = math.exp %36 : vector<8x8xf32>
    %cst_25 = arith.constant dense<0.000000e+00> : vector<8xf32>
    %38 = vector.multi_reduction <add>, %37, %cst_25 [1] : vector<8x8xf32> to vector<8xf32>
    %39 = vector.shape_cast %38 : vector<8xf32> to vector<8x1xf32>
    %40 = tpu.reciprocal %39 {approx = true} : vector<8x1xf32> -> vector<8x1xf32>
    %41 = vector.broadcast %40 : vector<8x1xf32> to vector<8x8xf32>
    %42 = arith.mulf %37, %41 : vector<8x8xf32>
    %43 = arith.truncf %42 : vector<8x8xf32> to vector<8x8xbf16>
    %cst_26 = arith.constant dense<0.000000e+00> : vector<8x8xf32>
    %44 = tpu.matmul %43, %31, %cst_26 {dimension_numbers = #tpu.dot_dimension_numbers<[1], [0], [0], [1], [0, 0, 1, 1], [], []>} : vector<8x8xbf16>, vector<8x8xbf16>, vector<8x8xf32> -> vector<8x8xf32>
    %45 = vector.extract_strided_slice %12 {offsets = [0, 8], sizes = [8, 8], strides = [1, 1]} : vector<8x32xbf16> to vector<8x8xbf16>
    %46 = vector.extract_strided_slice %20 {offsets = [0, 8], sizes = [8, 8], strides = [1, 1]} : vector<8x32xbf16> to vector<8x8xbf16>
    %47 = vector.extract_strided_slice %28 {offsets = [0, 8], sizes = [8, 8], strides = [1, 1]} : vector<8x32xbf16> to vector<8x8xbf16>
    %cst_27 = arith.constant dense<0.000000e+00> : vector<8x8xf32>
    %48 = tpu.matmul %45, %46, %cst_27 {dimension_numbers = #tpu.dot_dimension_numbers<[1], [1], [0], [0], [0, 0, 1, 0], [], []>} : vector<8x8xbf16>, vector<8x8xbf16>, vector<8x8xf32> -> vector<8x8xf32>
    %cst_28 = arith.constant dense<0xFF800000> : vector<8xf32>
    %49 = vector.multi_reduction <maximumf>, %48, %cst_28 [1] : vector<8x8xf32> to vector<8xf32>
    %50 = vector.shape_cast %49 : vector<8xf32> to vector<8x1xf32>
    %51 = vector.broadcast %50 : vector<8x1xf32> to vector<8x8xf32>
    %52 = arith.subf %48, %51 : vector<8x8xf32>
    %53 = math.exp %52 : vector<8x8xf32>
    %cst_29 = arith.constant dense<0.000000e+00> : vector<8xf32>
    %54 = vector.multi_reduction <add>, %53, %cst_29 [1] : vector<8x8xf32> to vector<8xf32>
    %55 = vector.shape_cast %54 : vector<8xf32> to vector<8x1xf32>
    %56 = tpu.reciprocal %55 {approx = true} : vector<8x1xf32> -> vector<8x1xf32>
    %57 = vector.broadcast %56 : vector<8x1xf32> to vector<8x8xf32>
    %58 = arith.mulf %53, %57 : vector<8x8xf32>
    %59 = arith.truncf %58 : vector<8x8xf32> to vector<8x8xbf16>
    %cst_30 = arith.constant dense<0.000000e+00> : vector<8x8xf32>
    %60 = tpu.matmul %59, %47, %cst_30 {dimension_numbers = #tpu.dot_dimension_numbers<[1], [0], [0], [1], [0, 0, 1, 1], [], []>} : vector<8x8xbf16>, vector<8x8xbf16>, vector<8x8xf32> -> vector<8x8xf32>
    %61 = vector.extract_strided_slice %12 {offsets = [0, 16], sizes = [8, 8], strides = [1, 1]} : vector<8x32xbf16> to vector<8x8xbf16>
    %62 = vector.extract_strided_slice %20 {offsets = [0, 16], sizes = [8, 8], strides = [1, 1]} : vector<8x32xbf16> to vector<8x8xbf16>
    %63 = vector.extract_strided_slice %28 {offsets = [0, 16], sizes = [8, 8], strides = [1, 1]} : vector<8x32xbf16> to vector<8x8xbf16>
    %cst_31 = arith.constant dense<0.000000e+00> : vector<8x8xf32>
    %64 = tpu.matmul %61, %62, %cst_31 {dimension_numbers = #tpu.dot_dimension_numbers<[1], [1], [0], [0], [0, 0, 1, 0], [], []>} : vector<8x8xbf16>, vector<8x8xbf16>, vector<8x8xf32> -> vector<8x8xf32>
    %cst_32 = arith.constant dense<0xFF800000> : vector<8xf32>
    %65 = vector.multi_reduction <maximumf>, %64, %cst_32 [1] : vector<8x8xf32> to vector<8xf32>
    %66 = vector.shape_cast %65 : vector<8xf32> to vector<8x1xf32>
    %67 = vector.broadcast %66 : vector<8x1xf32> to vector<8x8xf32>
    %68 = arith.subf %64, %67 : vector<8x8xf32>
    %69 = math.exp %68 : vector<8x8xf32>
    %cst_33 = arith.constant dense<0.000000e+00> : vector<8xf32>
    %70 = vector.multi_reduction <add>, %69, %cst_33 [1] : vector<8x8xf32> to vector<8xf32>
    %71 = vector.shape_cast %70 : vector<8xf32> to vector<8x1xf32>
    %72 = tpu.reciprocal %71 {approx = true} : vector<8x1xf32> -> vector<8x1xf32>
    %73 = vector.broadcast %72 : vector<8x1xf32> to vector<8x8xf32>
    %74 = arith.mulf %69, %73 : vector<8x8xf32>
    %75 = arith.truncf %74 : vector<8x8xf32> to vector<8x8xbf16>
    %cst_34 = arith.constant dense<0.000000e+00> : vector<8x8xf32>
    %76 = tpu.matmul %75, %63, %cst_34 {dimension_numbers = #tpu.dot_dimension_numbers<[1], [0], [0], [1], [0, 0, 1, 1], [], []>} : vector<8x8xbf16>, vector<8x8xbf16>, vector<8x8xf32> -> vector<8x8xf32>
    %77 = vector.extract_strided_slice %12 {offsets = [0, 24], sizes = [8, 8], strides = [1, 1]} : vector<8x32xbf16> to vector<8x8xbf16>
    %78 = vector.extract_strided_slice %20 {offsets = [0, 24], sizes = [8, 8], strides = [1, 1]} : vector<8x32xbf16> to vector<8x8xbf16>
    %79 = vector.extract_strided_slice %28 {offsets = [0, 24], sizes = [8, 8], strides = [1, 1]} : vector<8x32xbf16> to vector<8x8xbf16>
    %cst_35 = arith.constant dense<0.000000e+00> : vector<8x8xf32>
    %80 = tpu.matmul %77, %78, %cst_35 {dimension_numbers = #tpu.dot_dimension_numbers<[1], [1], [0], [0], [0, 0, 1, 0], [], []>} : vector<8x8xbf16>, vector<8x8xbf16>, vector<8x8xf32> -> vector<8x8xf32>
    %cst_36 = arith.constant dense<0xFF800000> : vector<8xf32>
    %81 = vector.multi_reduction <maximumf>, %80, %cst_36 [1] : vector<8x8xf32> to vector<8xf32>
    %82 = vector.shape_cast %81 : vector<8xf32> to vector<8x1xf32>
    %83 = vector.broadcast %82 : vector<8x1xf32> to vector<8x8xf32>
    %84 = arith.subf %80, %83 : vector<8x8xf32>
    %85 = math.exp %84 : vector<8x8xf32>
    %cst_37 = arith.constant dense<0.000000e+00> : vector<8xf32>
    %86 = vector.multi_reduction <add>, %85, %cst_37 [1] : vector<8x8xf32> to vector<8xf32>
    %87 = vector.shape_cast %86 : vector<8xf32> to vector<8x1xf32>
    %88 = tpu.reciprocal %87 {approx = true} : vector<8x1xf32> -> vector<8x1xf32>
    %89 = vector.broadcast %88 : vector<8x1xf32> to vector<8x8xf32>
    %90 = arith.mulf %85, %89 : vector<8x8xf32>
    %91 = arith.truncf %90 : vector<8x8xf32> to vector<8x8xbf16>
    %cst_38 = arith.constant dense<0.000000e+00> : vector<8x8xf32>
    %92 = tpu.matmul %91, %79, %cst_38 {dimension_numbers = #tpu.dot_dimension_numbers<[1], [0], [0], [1], [0, 0, 1, 1], [], []>} : vector<8x8xbf16>, vector<8x8xbf16>, vector<8x8xf32> -> vector<8x8xf32>
    %93 = tpu.concatenate %44, %60, %76, %92 in 1 : vector<8x8xf32>, vector<8x8xf32>, vector<8x8xf32>, vector<8x8xf32> -> vector<8x32xf32>
    %94 = arith.truncf %93 : vector<8x32xf32> to vector<8x32xbf16>
    %c0_39 = arith.constant 0 : index
    %c0_40 = arith.constant 0 : index
    %95 = vector.load %arg12[%c0_39, %c0_40] : memref<8x32xf32, #tpu.memory_space<vmem>>, vector<8x32xf32>
    %c0_41 = arith.constant 0 : index
    %c0_42 = arith.constant 0 : index
    %c0_43 = arith.constant 0 : index
    %96 = vector.load %arg9[%c0_41, %c0_42, %c0_43] : memref<1x32x32xbf16, #tpu.memory_space<vmem>>, vector<1x32x32xbf16>
    %97 = vector.shape_cast %96 : vector<1x32x32xbf16> to vector<32x32xbf16>
    %cst_44 = arith.constant dense<0.000000e+00> : vector<8x32xf32>
    %98 = tpu.matmul %94, %97, %cst_44 {dimension_numbers = #tpu.dot_dimension_numbers<[1], [0], [0], [1], [0, 0, 1, 1], [], []>} : vector<8x32xbf16>, vector<32x32xbf16>, vector<8x32xf32> -> vector<8x32xf32>
    %99 = arith.addf %95, %98 : vector<8x32xf32>
    %c0_45 = arith.constant 0 : index
    %c0_46 = arith.constant 0 : index
    %100 = vector.load %arg12[%c0_45, %c0_46] : memref<8x32xf32, #tpu.memory_space<vmem>>, vector<8x32xf32>
    tpu.vector_store %arg12[%c0_45, %c0_46], %99 {strides = array<i32>} : memref<8x32xf32, #tpu.memory_space<vmem>>, vector<8x32xf32>,
    %c0_i32_47 = arith.constant 0 : i32
    %101 = arith.cmpi eq, %arg1, %c0_i32_47 : i32
    %102 = arith.extui %101 : i1 to i32
    %c0_i32_48 = arith.constant 0 : i32
    %103 = arith.cmpi ne, %102, %c0_i32_48 : i32
    scf.if %103 {
      %c0_49 = arith.constant 0 : index
      %c0_50 = arith.constant 0 : index
      %104 = vector.load %arg12[%c0_49, %c0_50] : memref<8x32xf32, #tpu.memory_space<vmem>>, vector<8x32xf32>
      %c0_51 = arith.constant 0 : index
      %c0_52 = arith.constant 0 : index
      %105 = vector.load %arg10[%c0_51, %c0_52] : memref<1x32xf32, #tpu.memory_space<vmem>>, vector<1x32xf32>
      %106 = vector.broadcast %105 : vector<1x32xf32> to vector<8x32xf32>
      %107 = arith.addf %104, %106 : vector<8x32xf32>
      %c0_53 = arith.constant 0 : index
      %c0_54 = arith.constant 0 : index
      %c0_55 = arith.constant 0 : index
      %108 = vector.load %arg11[%c0_53, %c0_54, %c0_55] : memref<1x8x32xf32, #tpu.memory_space<vmem>>, vector<1x8x32xf32>
      %109 = vector.shape_cast %108 : vector<1x8x32xf32> to vector<8x32xf32>
      %110 = vector.shape_cast %107 : vector<8x32xf32> to vector<1x8x32xf32>
      tpu.vector_store %arg11[%c0_53, %c0_54, %c0_55], %110 {strides = array<i32>} : memref<1x8x32xf32, #tpu.memory_space<vmem>>, vector<1x8x32xf32>,
    } else {
    }
    return
  }
  func.func @transform_0(%arg0: i32, %arg1: i32) -> (i32, i32, i32) {
    %c0_i32 = arith.constant 0 : i32
    %c0_i32_0 = arith.constant 0 : i32
    %c0_i32_1 = arith.constant 0 : i32
    return %arg0, %c0_i32, %c0_i32_0 : i32, i32, i32
  }
  func.func @transform_1(%arg0: i32, %arg1: i32) -> (i32, i32, i32) {
    %c0_i32 = arith.constant 0 : i32
    %c0_i32_0 = arith.constant 0 : i32
    %c0_i32_1 = arith.constant 0 : i32
    return %arg1, %c0_i32, %c0_i32_0 : i32, i32, i32
  }
  func.func @transform_2(%arg0: i32, %arg1: i32) -> (i32, i32, i32) {
    %c0_i32 = arith.constant 0 : i32
    %c0_i32_0 = arith.constant 0 : i32
    %c0_i32_1 = arith.constant 0 : i32
    return %arg1, %c0_i32, %c0_i32_0 : i32, i32, i32
  }
  func.func @transform_3(%arg0: i32, %arg1: i32) -> (i32, i32, i32) {
    %c0_i32 = arith.constant 0 : i32
    %c0_i32_0 = arith.constant 0 : i32
    %c0_i32_1 = arith.constant 0 : i32
    return %arg1, %c0_i32, %c0_i32_0 : i32, i32, i32
  }
  func.func @transform_4(%arg0: i32, %arg1: i32) -> (i32, i32, i32) {
    %c0_i32 = arith.constant 0 : i32
    %c0_i32_0 = arith.constant 0 : i32
    %c0_i32_1 = arith.constant 0 : i32
    return %arg1, %c0_i32, %c0_i32_0 : i32, i32, i32
  }
  func.func @transform_5(%arg0: i32, %arg1: i32) -> (i32, i32, i32) {
    %c0_i32 = arith.constant 0 : i32
    %c0_i32_0 = arith.constant 0 : i32
    %c0_i32_1 = arith.constant 0 : i32
    return %arg1, %c0_i32, %c0_i32_0 : i32, i32, i32
  }
  func.func @transform_6(%arg0: i32, %arg1: i32) -> (i32, i32, i32) {
    %c0_i32 = arith.constant 0 : i32
    %c0_i32_0 = arith.constant 0 : i32
    %c0_i32_1 = arith.constant 0 : i32
    return %arg1, %c0_i32, %c0_i32_0 : i32, i32, i32
  }
  func.func @transform_7(%arg0: i32, %arg1: i32) -> (i32, i32, i32) {
    %c0_i32 = arith.constant 0 : i32
    %c0_i32_0 = arith.constant 0 : i32
    %c0_i32_1 = arith.constant 0 : i32
    return %arg1, %c0_i32, %c0_i32_0 : i32, i32, i32
  }
  func.func @transform_8(%arg0: i32, %arg1: i32) -> (i32, i32) {
    %c0_i32 = arith.constant 0 : i32
    %c0_i32_0 = arith.constant 0 : i32
    %c0_i32_1 = arith.constant 0 : i32
    return %c0_i32, %c0_i32_0 : i32, i32
  }
  func.func @transform_9(%arg0: i32, %arg1: i32) -> (i32, i32, i32) {
    %c0_i32 = arith.constant 0 : i32
    %c0_i32_0 = arith.constant 0 : i32
    %c0_i32_1 = arith.constant 0 : i32
    return %arg0, %c0_i32, %c0_i32_0 : i32, i32, i32
  }
}

</mosaic_0001>

<llo_original>
// kernel: tpu_custom_call.1
$region0: #{tpu_custom_call.1}
  #allocation0 [shape = 'u32[]', space=smem, size = 0x4, offset = 0x4, fixed_abs, tag = 'smem constant byte address 0x4 - core index']
  #allocation1 [shape = 'u32[144,128]{1,0:T(1,128)}', space=vmem, size = 0x12000, scoped, tag = 'internal scratch']
  #allocation2 [shape = 'f32[8,32]{1,0:T(8,128)}', space=vmem, size = 0x1000, scoped, tag = 'scratch operand']
  %s0 = inlined_call_operand.hbm [shape: bf16[2,8,32], index: 0, kind: input, shape index: {}]
  %s1 = inlined_call_operand.hbm [shape: bf16[1,32,32], index: 1, kind: input, shape index: {}]
  %s2 = inlined_call_operand.vmem [shape: f32[1,1,32], index: 2, kind: input, shape index: {}]
  %s3 = inlined_call_operand.hbm [shape: bf16[1,32,32], index: 3, kind: input, shape index: {}]
  %s4 = inlined_call_operand.vmem [shape: f32[1,1,32], index: 4, kind: input, shape index: {}]
  %s5 = inlined_call_operand.vmem [shape: bf16[1,32,32], index: 5, kind: input, shape index: {}]
  %s6 = inlined_call_operand.vmem [shape: f32[1,1,32], index: 6, kind: input, shape index: {}]
  %s7 = inlined_call_operand.hbm [shape: bf16[1,32,32], index: 7, kind: input, shape index: {}]
  %s8 = inlined_call_operand.vmem [shape: f32[1,32], index: 8, kind: input, shape index: {}]
  %s9 = inlined_call_operand.hbm [shape: f32[2,8,32], index: 9, kind: output, shape index: {}]
  %s10 = sld [smem:[#allocation0]]
  $region93: #{tpu_custom_call.1} parent=0
    _
  %s12 = ssub.s32 1, %s10
  %s13 = scalar_select 0, %s12, %s10
  $region1: #{tpu_custom_call.1} parent=0
    #allocation3 [shape = 'u8[4096]{0}', space=vmem, size = 0x1000, scoped, tag = 'input window, operand 0']
    #allocation4 [shape = 's32[2]{0}', space=sflag, size = 0x8, scoped, tag = 'scoped memory for tpu_custom_call.1']
    #allocation5 [shape = 's32[2]{0}', space=sflag, size = 0x8, scoped, tag = 'scoped memory for tpu_custom_call.1']
    #allocation6 [shape = 'u8[8192]{0}', space=vmem, size = 0x2000, scoped, tag = 'input window, operand 1, single buffered']
    #allocation7 [shape = 's32[1]{0}', space=sflag, size = 0x4, scoped, tag = 'scoped memory for tpu_custom_call.1']
    #allocation8 [shape = 'u8[8192]{0}', space=vmem, size = 0x2000, scoped, tag = 'input window, operand 3, single buffered']
    #allocation9 [shape = 'u8[8192]{0}', space=vmem, size = 0x2000, scoped, tag = 'input window, operand 7, single buffered']
    #allocation10 [shape = 's32[1]{0}', space=sflag, size = 0x4, scoped, tag = 'scoped memory for tpu_custom_call.1']
    #allocation11 [shape = 'u8[8192]{0}', space=vmem, size = 0x2000, scoped, tag = 'output window, operand 0']
    %14 = vsyncpa [#allocation4], 0
    %s15 = scalar_lea.sflag [#allocation4], 1
    %16 = vsyncpa %s15, 0
    %17 = vsyncpa [#allocation7], 0
    %18 = vsyncpa [#allocation10], 0
    %19 = vsyncpa [#allocation5], 0
    %s20 = scalar_lea.sflag [#allocation5], 1
    %21 = vsyncpa %s20, 0
    loop: start=0, step=1, limit=4
    $region2: #{tpu_custom_call.1} parent=1 // loop_pre_header
      _
    $region3: #{tpu_custom_call.1} parent=1 // loop_header
      %s23 = sphi 0, %s27
      %p24 = scmp.ge.s32.totalorder %s23, 4
      %s30 = sphi 0, %s42
      %s31 = sphi 0, %s38
      %s32 = sphi 0, %s30
      %s33 = sphi 0, %s31
      %s34 = sphi 0, %s32
      %s35 = sphi 0, %s33
      %s45 = sphi 0, %s47
      %s48 = sphi 0, %s45
      %s49 = sphi 0, %s48
      %s65 = sphi 0, %s49
      %s71 = sphi 0, %s73
      %s74 = sphi 0, %s71
      %s75 = sphi 0, %s74
      %s91 = sphi 0, %s75
      %s97 = sphi 0, %s99
      %s100 = sphi 0, %s97
      %s101 = sphi 0, %s100
      %s117 = sphi 0, %s101
      %s123 = sphi 0, %s125
      %s126 = sphi 0, %s123
      %s127 = sphi 0, %s126
      %s143 = sphi 0, %s127
      %s149 = sphi 0, %s151
      %s152 = sphi 0, %s149
      %s153 = sphi 0, %s152
      %s169 = sphi 0, %s153
      %s175 = sphi 0, %s177
      %s178 = sphi 0, %s175
      %s179 = sphi 0, %s178
      %s195 = sphi 0, %s179
      %s201 = sphi 0, %s203
      %s204 = sphi 0, %s201
      %s205 = sphi 0, %s204
      %s221 = sphi 0, %s205
      %s227 = sphi 0, %s229
      %s230 = sphi 0, %s227
      %s231 = sphi 0, %s230
      %s247 = sphi 0, %s231
      %s251 = sphi 0, %s251
      %s253 = sphi 0, %s251
      %s254 = sphi 0, %s253
      %s268 = sphi 0, %s254
      %s274 = sphi 0, %s276
      %s277 = sphi 0, %s274
      %s278 = sphi 0, %s277
      %s294 = sphi 0, %s278
    $region4: #{tpu_custom_call.1} parent=1 // loop_header_branch
      %26 = sbr.rel (%p24) target = $region8
    $region5: #{tpu_custom_call.1} parent=1 // loop_body
      %s28 = ssub.s32 %s23, 1
      %s29 = ssub.s32 %s23, 2
      %s36 = sadd.s32 1, %s31
      %p37 = scmp.ge.s32.totalorder %s36, 1
      %s38 = scalar_select %p37, 0, %s36
      %s39 = sadd.s32 1, %s30
      %s40 = scalar_select %p37, %s39, %s30
      %p41 = scmp.ge.s32.totalorder %s40, 2
      %s42 = scalar_select %p41, 0, %s40
      %s43 = ssub.s32 %s30, %s42
      %p44 = scmp.eq.s32.totalorder %s43, 0
      %s46 = sadd.s32 %s45, 1
      %s47 = scalar_select %p44, %s45, %s46
      %p50 = pneg %p44
      %p51 = scmp.eq.s32.totalorder %s23, 1
      %p52 = por %p50, %p51
      %p53 = scmp.ne.s32.totalorder %s45, %s48
      %p54 = scmp.eq.s32.totalorder %s23, 0
      %p55 = por %p53, %p54
      %p56 = scmp.ne.s32.totalorder %s45, %s48
      %p57 = scmp.eq.s32.totalorder %s28, 1
      %p58 = por %p56, %p57
      %p59 = scmp.ne.s32.totalorder %s48, %s49
      %p60 = scmp.eq.s32.totalorder %s28, 0
      %p61 = por %p59, %p60
      %p62 = scmp.ne.s32.totalorder %s48, %s49
      %p63 = scmp.eq.s32.totalorder %s29, 1
      %p64 = por %p62, %p63
      %p66 = scmp.ne.s32.totalorder %s49, %s65
      %p67 = scmp.eq.s32.totalorder %s29, 0
      %p68 = por %p66, %p67
      %s69 = ssub.s32 %s31, %s38
      %p70 = scmp.eq.s32.totalorder %s69, 0
      %s72 = sadd.s32 %s71, 1
      %s73 = scalar_select %p70, %s71, %s72
      %p76 = pneg %p70
      %p77 = scmp.eq.s32.totalorder %s23, 1
      %p78 = por %p76, %p77
      %p79 = scmp.ne.s32.totalorder %s71, %s74
      %p80 = scmp.eq.s32.totalorder %s23, 0
      %p81 = por %p79, %p80
      %p82 = scmp.ne.s32.totalorder %s71, %s74
      %p83 = scmp.eq.s32.totalorder %s28, 1
      %p84 = por %p82, %p83
      %p85 = scmp.ne.s32.totalorder %s74, %s75
      %p86 = scmp.eq.s32.totalorder %s28, 0
      %p87 = por %p85, %p86
      %p88 = scmp.ne.s32.totalorder %s74, %s75
      %p89 = scmp.eq.s32.totalorder %s29, 1
      %p90 = por %p88, %p89
      %p92 = scmp.ne.s32.totalorder %s75, %s91
      %p93 = scmp.eq.s32.totalorder %s29, 0
      %p94 = por %p92, %p93
      %s95 = ssub.s32 %s31, %s38
      %p96 = scmp.eq.s32.totalorder %s95, 0
      %s98 = sadd.s32 %s97, 1
      %s99 = scalar_select %p96, %s97, %s98
      %p102 = pneg %p96
      %p103 = scmp.eq.s32.totalorder %s23, 1
      %p104 = por %p102, %p103
      %p105 = scmp.ne.s32.totalorder %s97, %s100
      %p106 = scmp.eq.s32.totalorder %s23, 0
      %p107 = por %p105, %p106
      %p108 = scmp.ne.s32.totalorder %s97, %s100
      %p109 = scmp.eq.s32.totalorder %s28, 1
      %p110 = por %p108, %p109
      %p111 = scmp.ne.s32.totalorder %s100, %s101
      %p112 = scmp.eq.s32.totalorder %s28, 0
      %p113 = por %p111, %p112
      %p114 = scmp.ne.s32.totalorder %s100, %s101
      %p115 = scmp.eq.s32.totalorder %s29, 1
      %p116 = por %p114, %p115
      %p118 = scmp.ne.s32.totalorder %s101, %s117
      %p119 = scmp.eq.s32.totalorder %s29, 0
      %p120 = por %p118, %p119
      %s121 = ssub.s32 %s31, %s38
      %p122 = scmp.eq.s32.totalorder %s121, 0
      %s124 = sadd.s32 %s123, 1
      %s125 = scalar_select %p122, %s123, %s124
      %p128 = pneg %p122
      %p129 = scmp.eq.s32.totalorder %s23, 1
      %p130 = por %p128, %p129
      %p131 = scmp.ne.s32.totalorder %s123, %s126
      %p132 = scmp.eq.s32.totalorder %s23, 0
      %p133 = por %p131, %p132
      %p134 = scmp.ne.s32.totalorder %s123, %s126
      %p135 = scmp.eq.s32.totalorder %s28, 1
      %p136 = por %p134, %p135
      %p137 = scmp.ne.s32.totalorder %s126, %s127
      %p138 = scmp.eq.s32.totalorder %s28, 0
      %p139 = por %p137, %p138
      %p140 = scmp.ne.s32.totalorder %s126, %s127
      %p141 = scmp.eq.s32.totalorder %s29, 1
      %p142 = por %p140, %p141
      %p144 = scmp.ne.s32.totalorder %s127, %s143
      %p145 = scmp.eq.s32.totalorder %s29, 0
      %p146 = por %p144, %p145
      %s147 = ssub.s32 %s31, %s38
      %p148 = scmp.eq.s32.totalorder %s147, 0
      %s150 = sadd.s32 %s149, 1
      %s151 = scalar_select %p148, %s149, %s150
      %p154 = pneg %p148
      %p155 = scmp.eq.s32.totalorder %s23, 1
      %p156 = por %p154, %p155
      %p157 = scmp.ne.s32.totalorder %s149, %s152
      %p158 = scmp.eq.s32.totalorder %s23, 0
      %p159 = por %p157, %p158
      %p160 = scmp.ne.s32.totalorder %s149, %s152
      %p161 = scmp.eq.s32.totalorder %s28, 1
      %p162 = por %p160, %p161
      %p163 = scmp.ne.s32.totalorder %s152, %s153
      %p164 = scmp.eq.s32.totalorder %s28, 0
      %p165 = por %p163, %p164
      %p166 = scmp.ne.s32.totalorder %s152, %s153
      %p167 = scmp.eq.s32.totalorder %s29, 1
      %p168 = por %p166, %p167
      %p170 = scmp.ne.s32.totalorder %s153, %s169
      %p171 = scmp.eq.s32.totalorder %s29, 0
      %p172 = por %p170, %p171
      %s173 = ssub.s32 %s31, %s38
      %p174 = scmp.eq.s32.totalorder %s173, 0
      %s176 = sadd.s32 %s175, 1
      %s177 = scalar_select %p174, %s175, %s176
      %p180 = pneg %p174
      %p181 = scmp.eq.s32.totalorder %s23, 1
      %p182 = por %p180, %p181
      %p183 = scmp.ne.s32.totalorder %s175, %s178
      %p184 = scmp.eq.s32.totalorder %s23, 0
      %p185 = por %p183, %p184
      %p186 = scmp.ne.s32.totalorder %s175, %s178
      %p187 = scmp.eq.s32.totalorder %s28, 1
      %p188 = por %p186, %p187
      %p189 = scmp.ne.s32.totalorder %s178, %s179
      %p190 = scmp.eq.s32.totalorder %s28, 0
      %p191 = por %p189, %p190
      %p192 = scmp.ne.s32.totalorder %s178, %s179
      %p193 = scmp.eq.s32.totalorder %s29, 1
      %p194 = por %p192, %p193
      %p196 = scmp.ne.s32.totalorder %s179, %s195
      %p197 = scmp.eq.s32.totalorder %s29, 0
      %p198 = por %p196, %p197
      %s199 = ssub.s32 %s31, %s38
      %p200 = scmp.eq.s32.totalorder %s199, 0
      %s202 = sadd.s32 %s201, 1
      %s203 = scalar_select %p200, %s201, %s202
      %p206 = pneg %p200
      %p207 = scmp.eq.s32.totalorder %s23, 1
      %p208 = por %p206, %p207
      %p209 = scmp.ne.s32.totalorder %s201, %s204
      %p210 = scmp.eq.s32.totalorder %s23, 0
      %p211 = por %p209, %p210
      %p212 = scmp.ne.s32.totalorder %s201, %s204
      %p213 = scmp.eq.s32.totalorder %s28, 1
      %p214 = por %p212, %p213
      %p215 = scmp.ne.s32.totalorder %s204, %s205
      %p216 = scmp.eq.s32.totalorder %s28, 0
      %p217 = por %p215, %p216
      %p218 = scmp.ne.s32.totalorder %s204, %s205
      %p219 = scmp.eq.s32.totalorder %s29, 1
      %p220 = por %p218, %p219
      %p222 = scmp.ne.s32.totalorder %s205, %s221
      %p223 = scmp.eq.s32.totalorder %s29, 0
      %p224 = por %p222, %p223
      %s225 = ssub.s32 %s31, %s38
      %p226 = scmp.eq.s32.totalorder %s225, 0
      %s228 = sadd.s32 %s227, 1
      %s229 = scalar_select %p226, %s227, %s228
      %p232 = pneg %p226
      %p233 = scmp.eq.s32.totalorder %s23, 1
      %p234 = por %p232, %p233
      %p235 = scmp.ne.s32.totalorder %s227, %s230
      %p236 = scmp.eq.s32.totalorder %s23, 0
      %p237 = por %p235, %p236
      %p238 = scmp.ne.s32.totalorder %s227, %s230
      %p239 = scmp.eq.s32.totalorder %s28, 1
      %p240 = por %p238, %p239
      %p241 = scmp.ne.s32.totalorder %s230, %s231
      %p242 = scmp.eq.s32.totalorder %s28, 0
      %p243 = por %p241, %p242
      %p244 = scmp.ne.s32.totalorder %s230, %s231
      %p245 = scmp.eq.s32.totalorder %s29, 1
      %p246 = por %p244, %p245
      %p248 = scmp.ne.s32.totalorder %s231, %s247
      %p249 = scmp.eq.s32.totalorder %s29, 0
      %p250 = por %p248, %p249
      %s252 = sadd.s32 %s251, 1
      %p255 = scmp.eq.s32.totalorder %s23, 1
      %p256 = scmp.ne.s32.totalorder %s251, %s253
      %p257 = scmp.eq.s32.totalorder %s23, 0
      %p258 = por %p256, %p257
      %p259 = scmp.ne.s32.totalorder %s251, %s253
      %p260 = scmp.eq.s32.totalorder %s28, 1
      %p261 = por %p259, %p260
      %p262 = scmp.ne.s32.totalorder %s253, %s254
      %p263 = scmp.eq.s32.totalorder %s28, 0
      %p264 = por %p262, %p263
      %p265 = scmp.ne.s32.totalorder %s253, %s254
      %p266 = scmp.eq.s32.totalorder %s29, 1
      %p267 = por %p265, %p266
      %p269 = scmp.ne.s32.totalorder %s254, %s268
      %p270 = scmp.eq.s32.totalorder %s29, 0
      %p271 = por %p269, %p270
      %s272 = ssub.s32 %s30, %s42
      %p273 = scmp.eq.s32.totalorder %s272, 0
      %s275 = sadd.s32 %s274, 1
      %s276 = scalar_select %p273, %s274, %s275
      %p279 = pneg %p273
      %p280 = scmp.eq.s32.totalorder %s23, 1
      %p281 = por %p279, %p280
      %p282 = scmp.ne.s32.totalorder %s274, %s277
      %p283 = scmp.eq.s32.totalorder %s23, 0
      %p284 = por %p282, %p283
      %p285 = scmp.ne.s32.totalorder %s274, %s277
      %p286 = scmp.eq.s32.totalorder %s28, 1
      %p287 = por %p285, %p286
      %p288 = scmp.ne.s32.totalorder %s277, %s278
      %p289 = scmp.eq.s32.totalorder %s28, 0
      %p290 = por %p288, %p289
      %p291 = scmp.ne.s32.totalorder %s277, %s278
      %p292 = scmp.eq.s32.totalorder %s29, 1
      %p293 = por %p291, %p292
      %p295 = scmp.ne.s32.totalorder %s278, %s294
      %p296 = scmp.eq.s32.totalorder %s29, 0
      %p297 = por %p295, %p296
      %p298 = scmp.le.s32.totalorder 1, %s23
      %p299 = scmp.lt.s32.totalorder %s23, 3
      %p300 = pnand %p298, %p299
      %p301 = pneg %p300
      // Predicated region
      $region9: #{tpu_custom_call.1} parent=5 // pred_check
        _
      $region10: #{tpu_custom_call.1} parent=5 // pred_check_branch
        %303 = sbr.rel (%p300) target = $region12
      $region11: #{tpu_custom_call.1} parent=5 // pred_region
        %s304 = ssub.s32 %s23, 1
        // Predicated region
        $region13: #{tpu_custom_call.1} parent=11 // pred_check
          %p305 = pneg %p87
        $region14: #{tpu_custom_call.1} parent=11 // pred_check_branch
          %307 = sbr.rel (%p305) target = $region16
        $region15: #{tpu_custom_call.1} parent=11 // pred_region
          %s309 = ssub.s32 256, 256
          %310 = vsyncadd [#allocation7], %s309
          %s311 = smul.addr %s33, 4
          %s312 = smul.addr %s311, 64
          %s313 = scalar_lea.hbm %s1, %s312
          %s314 = sshll.u32 [#allocation6], 4
          %s315 = int_to_ptr.vmem [resolvable:$true] %s314
          %320 = dma.hbm_to_vmem [thread:$0]  %s313, 256, %s315, [#allocation7], 64, 64, 4
        $region16: #{tpu_custom_call.1} parent=11 // pred_fallthru
          _
        // Predicated region
        $region17: #{tpu_custom_call.1} parent=11 // pred_check
          %p321 = pneg %p113
        $region18: #{tpu_custom_call.1} parent=11 // pred_check_branch
          %323 = sbr.rel (%p321) target = $region20
        $region19: #{tpu_custom_call.1} parent=11 // pred_region
          %p324 = scmp.lt.s32.totalorder %s33, 0
          %s325 = scalar_select %p324, %s33, 0
          %s326 = scalar_lea.vmem %s2, %s325
        $region20: #{tpu_custom_call.1} parent=11 // pred_fallthru
          _
        // Predicated region
        $region21: #{tpu_custom_call.1} parent=11 // pred_check
          %p327 = pneg %p139
        $region22: #{tpu_custom_call.1} parent=11 // pred_check_branch
          %329 = sbr.rel (%p327) target = $region24
        $region23: #{tpu_custom_call.1} parent=11 // pred_region
          %s331 = ssub.s32 256, 256
          %332 = vsyncadd [#allocation7], %s331
          %s333 = smul.addr %s33, 4
          %s334 = smul.addr %s333, 64
          %s335 = scalar_lea.hbm %s3, %s334
          %s336 = sshll.u32 [#allocation8], 4
          %s337 = int_to_ptr.vmem [resolvable:$true] %s336
          %342 = dma.hbm_to_vmem [thread:$0]  %s335, 256, %s337, [#allocation7], 64, 64, 4
        $region24: #{tpu_custom_call.1} parent=11 // pred_fallthru
          _
        // Predicated region
        $region25: #{tpu_custom_call.1} parent=11 // pred_check
          %p343 = pneg %p165
        $region26: #{tpu_custom_call.1} parent=11 // pred_check_branch
          %345 = sbr.rel (%p343) target = $region28
        $region27: #{tpu_custom_call.1} parent=11 // pred_region
          %p346 = scmp.lt.s32.totalorder %s33, 0
          %s347 = scalar_select %p346, %s33, 0
          %s348 = scalar_lea.vmem %s4, %s347
        $region28: #{tpu_custom_call.1} parent=11 // pred_fallthru
          _
        // Predicated region
        $region29: #{tpu_custom_call.1} parent=11 // pred_check
          %p349 = pneg %p191
        $region30: #{tpu_custom_call.1} parent=11 // pred_check_branch
          %351 = sbr.rel (%p349) target = $region32
        $region31: #{tpu_custom_call.1} parent=11 // pred_region
          %p352 = scmp.lt.s32.totalorder %s33, 0
          %s353 = scalar_select %p352, %s33, 0
          %s354 = smul.addr %s353, 4
          %s355 = smul.addr %s354, 4
          %s356 = scalar_lea.vmem %s5, %s355
        $region32: #{tpu_custom_call.1} parent=11 // pred_fallthru
          _
        // Predicated region
        $region33: #{tpu_custom_call.1} parent=11 // pred_check
          %p357 = pneg %p217
        $region34: #{tpu_custom_call.1} parent=11 // pred_check_branch
          %359 = sbr.rel (%p357) target = $region36
        $region35: #{tpu_custom_call.1} parent=11 // pred_region
          %p360 = scmp.lt.s32.totalorder %s33, 0
          %s361 = scalar_select %p360, %s33, 0
          %s362 = scalar_lea.vmem %s6, %s361
        $region36: #{tpu_custom_call.1} parent=11 // pred_fallthru
          _
        // Predicated region
        $region37: #{tpu_custom_call.1} parent=11 // pred_check
          %p363 = pneg %p243
        $region38: #{tpu_custom_call.1} parent=11 // pred_check_branch
          %365 = sbr.rel (%p363) target = $region40
        $region39: #{tpu_custom_call.1} parent=11 // pred_region
          %s367 = ssub.s32 256, 256
          %368 = vsyncadd [#allocation10], %s367
          %s369 = smul.addr %s33, 4
          %s370 = smul.addr %s369, 64
          %s371 = scalar_lea.hbm %s7, %s370
          %s372 = sshll.u32 [#allocation9], 4
          %s373 = int_to_ptr.vmem [resolvable:$true] %s372
          %378 = dma.hbm_to_vmem [thread:$0]  %s371, 256, %s373, [#allocation10], 64, 64, 4
        $region40: #{tpu_custom_call.1} parent=11 // pred_fallthru
          _
        // Predicated region
        $region41: #{tpu_custom_call.1} parent=11 // pred_check
          %p379 = pneg %p264
        $region42: #{tpu_custom_call.1} parent=11 // pred_check_branch
          %381 = sbr.rel (%p379) target = $region44
        $region43: #{tpu_custom_call.1} parent=11 // pred_region
          _
        $region44: #{tpu_custom_call.1} parent=11 // pred_fallthru
          _
      $region12: #{tpu_custom_call.1} parent=5 // pred_fallthru
        _
      %p382 = scmp.lt.s32.totalorder %s23, 2
      // Predicated region
      $region45: #{tpu_custom_call.1} parent=5 // pred_check
        %p383 = pneg %p382
      $region46: #{tpu_custom_call.1} parent=5 // pred_check_branch
        %385 = sbr.rel (%p383) target = $region48
      $region47: #{tpu_custom_call.1} parent=5 // pred_region
        // Predicated region
        $region49: #{tpu_custom_call.1} parent=47 // pred_check
          %p386 = pneg %p55
        $region50: #{tpu_custom_call.1} parent=47 // pred_check_branch
          %388 = sbr.rel (%p386) target = $region52
        $region51: #{tpu_custom_call.1} parent=47 // pred_region
          %s389 = sand.u32 %s45, 1
          %s390 = scalar_lea.sflag [#allocation4], %s389
          %s391 = sand.u32 %s45, 1
          %s392 = smul.addr %s391, 4
          %s393 = scalar_lea.vmem [#allocation3], %s392
          %s395 = ssub.s32 64, 64
          %396 = vsyncadd %s390, %s395
          %s397 = smul.addr %s30, 64
          %s398 = scalar_lea.hbm %s0, %s397
          %s400 = sshll.u32 %s393, 4
          %s401 = int_to_ptr.vmem [resolvable:$true] %s400
          %403 = dma.hbm_to_vmem [thread:$0]  %s398, 64, %s401, %s390
        $region52: #{tpu_custom_call.1} parent=47 // pred_fallthru
          _
      $region48: #{tpu_custom_call.1} parent=5 // pred_fallthru
        _
      %p404 = scmp.le.s32.totalorder 1, %s23
      %p405 = scmp.lt.s32.totalorder %s23, 3
      %p406 = pnand %p404, %p405
      %p407 = pneg %p406
      // Predicated region
      $region53: #{tpu_custom_call.1} parent=5 // pred_check
        _
      $region54: #{tpu_custom_call.1} parent=5 // pred_check_branch
        %409 = sbr.rel (%p406) target = $region56
      $region55: #{tpu_custom_call.1} parent=5 // pred_region
        %s410 = ssub.s32 %s23, 1
        %s411 = sand.u32 %s48, 1
        %s412 = scalar_lea.sflag [#allocation4], %s411
        %s413 = sand.u32 %s48, 1
        %s414 = smul.addr %s413, 4
        %s415 = scalar_lea.vmem [#allocation3], %s414
        // Predicated region
        $region57: #{tpu_custom_call.1} parent=55 // pred_check
          %p416 = pneg %p61
        $region58: #{tpu_custom_call.1} parent=55 // pred_check_branch
          %418 = sbr.rel (%p416) target = $region60
        $region59: #{tpu_custom_call.1} parent=55 // pred_region
          %419 = dma.done %s412, 64
        $region60: #{tpu_custom_call.1} parent=55 // pred_fallthru
          _
        // Predicated region
        $region61: #{tpu_custom_call.1} parent=55 // pred_check
          %p420 = pneg %p87
        $region62: #{tpu_custom_call.1} parent=55 // pred_check_branch
          %422 = sbr.rel (%p420) target = $region64
        $region63: #{tpu_custom_call.1} parent=55 // pred_region
          %423 = dma.done [#allocation7], 256
        $region64: #{tpu_custom_call.1} parent=55 // pred_fallthru
          _
        // Predicated region
        $region65: #{tpu_custom_call.1} parent=55 // pred_check
          %p424 = pneg %p139
        $region66: #{tpu_custom_call.1} parent=55 // pred_check_branch
          %426 = sbr.rel (%p424) target = $region68
        $region67: #{tpu_custom_call.1} parent=55 // pred_region
          %427 = dma.done [#allocation7], 256
        $region68: #{tpu_custom_call.1} parent=55 // pred_fallthru
          _
        // Predicated region
        $region69: #{tpu_custom_call.1} parent=55 // pred_check
          %p428 = pneg %p243
        $region70: #{tpu_custom_call.1} parent=55 // pred_check_branch
          %430 = sbr.rel (%p428) target = $region72
        $region71: #{tpu_custom_call.1} parent=55 // pred_region
          %431 = dma.done [#allocation10], 256
        $region72: #{tpu_custom_call.1} parent=55 // pred_fallthru
          _
        %s432 = sand.u32 %s48, 1
        %s433 = scalar_lea.sflag [#allocation4], %s432
        %s434 = sand.u32 %s48, 1
        %s435 = smul.addr %s434, 4
        %s436 = scalar_lea.vmem [#allocation3], %s435
        %p437 = pneg %p61
        %p438 = pneg %p58
        %p439 = pneg %p87
        %p440 = pneg %p84
        %p441 = scmp.lt.s32.totalorder %s33, 0
        %s442 = scalar_select %p441, %s33, 0
        %s443 = scalar_lea.vmem %s2, %s442
        %p444 = pneg %p113
        %p445 = pneg %p110
        %p446 = pneg %p139
        %p447 = pneg %p136
        %p448 = scmp.lt.s32.totalorder %s33, 0
        %s449 = scalar_select %p448, %s33, 0
        %s450 = scalar_lea.vmem %s4, %s449
        %p451 = pneg %p165
        %p452 = pneg %p162
        %p453 = scmp.lt.s32.totalorder %s33, 0
        %s454 = scalar_select %p453, %s33, 0
        %s455 = smul.addr %s454, 4
        %s456 = smul.addr %s455, 4
        %s457 = scalar_lea.vmem %s5, %s456
        %p458 = pneg %p191
        %p459 = pneg %p188
        %p460 = scmp.lt.s32.totalorder %s33, 0
        %s461 = scalar_select %p460, %s33, 0
        %s462 = scalar_lea.vmem %s6, %s461
        %p463 = pneg %p217
        %p464 = pneg %p214
        %p465 = pneg %p243
        %p466 = pneg %p240
        %p467 = pneg %p264
        %p468 = pneg %p261
        %p469 = pneg %p290
        %p470 = pneg %p287
        %s471 = sand.u32 %s277, 1
        %s472 = scalar_lea.sflag [#allocation5], %s471
        %s473 = sand.u32 %s277, 1
        %s474 = smul.addr %s473, 8
        %s475 = scalar_lea.vmem [#allocation11], %s474
        %p476 = scmp.lt.s32.totalorder %s33, 0
        %s477 = scalar_select %p476, %s33, 0
        %s478 = scalar_lea.vmem %s2, %s477
        %p479 = scmp.lt.s32.totalorder %s33, 0
        %s480 = scalar_select %p479, %s33, 0
        %s481 = scalar_lea.vmem %s4, %s480
        %p482 = scmp.lt.s32.totalorder %s33, 0
        %s483 = scalar_select %p482, %s33, 0
        %s484 = smul.addr %s483, 4
        %s485 = smul.addr %s484, 4
        %s486 = scalar_lea.vmem %s5, %s485
        %p487 = scmp.lt.s32.totalorder %s33, 0
        %s488 = scalar_select %p487, %s33, 0
        %s489 = scalar_lea.vmem %s6, %s488
        %p491 = scmp.eq.s32.totalorder %s33, 0
        // Predicated region
        $region73: #{tpu_custom_call.1} parent=55 // pred_check
          %p492 = pneg %p491
        $region74: #{tpu_custom_call.1} parent=55 // pred_check_branch
          %494 = sbr.rel (%p492) target = $region76
        $region75: #{tpu_custom_call.1} parent=55 // pred_region
          %vm495 = vcmask 261120
          %496 = vst.msk [vmem:[#allocation2] sm:$0xff] %vm495, 0.0
        $region76: #{tpu_custom_call.1} parent=55 // pred_fallthru
          _
        %v497 = vld [vmem:[%s415] sm:$0xf]
        %v498 = vld [vmem:[#allocation6] sm:$0xf]
        %v499 = vld [vmem:[#allocation6 + $0x4] sm:$0xf]
        %v500 = vld [vmem:[#allocation6 + $0x8] sm:$0xf]
        %v501 = vld [vmem:[#allocation6 + $0xc] sm:$0xf]
        %v502 = vld [vmem:[%s478] sm:$0x1]
        %v504 = vlaneseq
        %v505 = vshrl.u32 %v504, 7
        %v506 = vsub.s32 0, %v505
        %v507 = vrot.slane %v502, %v506
        %v513 = vunpack.c.l.b16 %v498
        %v514 = vunpack.c.l.b16 %v499
        %v515 = vunpack.c.l.b16 %v500
        %v516 = vunpack.c.l.b16 %v501
        %v517 = vpack.c.b16 %v514, %v513
        %v518 = vpack.c.b16 %v516, %v515
        %vm521 = vcmask 261120
        %v523 = vsel %vm521, %v497, 0
        %525 = vmatprep.subr.bf16.mxu0 0
        %526 = vmatpush1.bf16.msra.mxu0 %v517
        %527 = vmatprep.subr.bf16.mxu0 0
        %528 = vmatpush1.bf16.msra.mxu0 %v518
        %529 = vmatprep.subr.bf16.mxu0 0
        %530 = vmatpush1.bf16.msra.mxu0 0
        %531 = vmatprep.subr.bf16.mxu0 0
        %532 = vmatpush1.bf16.msra.mxu0 0
        %533 = vmatprep.subr.bf16.mxu0 0
        %534 = vmatpush1.bf16.msra.mxu0 0
        %535 = vmatprep.subr.bf16.mxu0 0
        %536 = vmatpush1.bf16.msra.mxu0 0
        %537 = vmatprep.subr.bf16.mxu0 0
        %538 = vmatpush1.bf16.msra.mxu0 0
        %539 = vmatprep.subr.bf16.mxu0 0
        %540 = vmatpush1.bf16.msra.mxu0 0
        %541 = vmatprep.subr.bf16.mxu0 0
        %542 = vmatpush1.bf16.msra.mxu0 0
        %543 = vmatprep.subr.bf16.mxu0 0
        %544 = vmatpush1.bf16.msra.mxu0 0
        %545 = vmatprep.subr.bf16.mxu0 0
        %546 = vmatpush1.bf16.msra.mxu0 0
        %547 = vmatprep.subr.bf16.mxu0 0
        %548 = vmatpush1.bf16.msra.mxu0 0
        %549 = vmatprep.subr.bf16.mxu0 0
        %550 = vmatpush1.bf16.msra.mxu0 0
        %551 = vmatprep.subr.bf16.mxu0 0
        %552 = vmatpush1.bf16.msra.mxu0 0
        %553 = vmatprep.subr.bf16.mxu0 0
        %554 = vmatpush1.bf16.msra.mxu0 0
        %555 = vmatprep.subr.bf16.mxu0 0
        %556 = vmatpush1.bf16.msra.mxu0 0
        %557 = vmatprep.mubr.bf16.mxu0 0
        %558 = vmatmul.mubr.bf16.gmra.mrb[0].mxu0 %v523
        %v559 = vpop.f32.mrb[0].mxu0
        %v560 = vadd.f32 %v507, %v559
        %v561 = vpop.f32.mrb[0].mxu0
        %v562 = vpop.f32.mrb[0].mxu0
        %v563 = vpop.f32.mrb[0].mxu0
        %564 = vdwg.mxu0
        %v565 = vpack.c.bf16 %v560, %v560
        %v566 = vld [vmem:[#allocation8] sm:$0xf]
        %v567 = vld [vmem:[#allocation8 + $0x4] sm:$0xf]
        %v568 = vld [vmem:[#allocation8 + $0x8] sm:$0xf]
        %v569 = vld [vmem:[#allocation8 + $0xc] sm:$0xf]
        %v570 = vld [vmem:[%s481] sm:$0x1]
        %v572 = vlaneseq
        %v573 = vshrl.u32 %v572, 7
        %v574 = vsub.s32 0, %v573
        %v575 = vrot.slane %v570, %v574
        %v581 = vunpack.c.l.b16 %v566
        %v582 = vunpack.c.l.b16 %v567
        %v583 = vunpack.c.l.b16 %v568
        %v584 = vunpack.c.l.b16 %v569
        %v585 = vpack.c.b16 %v582, %v581
        %v586 = vpack.c.b16 %v584, %v583
        %589 = vmatprep.subr.bf16.mxu0 0
        %590 = vmatpush1.bf16.msra.mxu0 %v585
        %591 = vmatprep.subr.bf16.mxu0 0
        %592 = vmatpush1.bf16.msra.mxu0 %v586
        %593 = vmatprep.subr.bf16.mxu0 0
        %594 = vmatpush1.bf16.msra.mxu0 0
        %595 = vmatprep.subr.bf16.mxu0 0
        %596 = vmatpush1.bf16.msra.mxu0 0
        %597 = vmatprep.subr.bf16.mxu0 0
        %598 = vmatpush1.bf16.msra.mxu0 0
        %599 = vmatprep.subr.bf16.mxu0 0
        %600 = vmatpush1.bf16.msra.mxu0 0
        %601 = vmatprep.subr.bf16.mxu0 0
        %602 = vmatpush1.bf16.msra.mxu0 0
        %603 = vmatprep.subr.bf16.mxu0 0
        %604 = vmatpush1.bf16.msra.mxu0 0
        %605 = vmatprep.subr.bf16.mxu0 0
        %606 = vmatpush1.bf16.msra.mxu0 0
        %607 = vmatprep.subr.bf16.mxu0 0
        %608 = vmatpush1.bf16.msra.mxu0 0
        %609 = vmatprep.subr.bf16.mxu0 0
        %610 = vmatpush1.bf16.msra.mxu0 0
        %611 = vmatprep.subr.bf16.mxu0 0
        %612 = vmatpush1.bf16.msra.mxu0 0
        %613 = vmatprep.subr.bf16.mxu0 0
        %614 = vmatpush1.bf16.msra.mxu0 0
        %615 = vmatprep.subr.bf16.mxu0 0
        %616 = vmatpush1.bf16.msra.mxu0 0
        %617 = vmatprep.subr.bf16.mxu0 0
        %618 = vmatpush1.bf16.msra.mxu0 0
        %619 = vmatprep.subr.bf16.mxu0 0
        %620 = vmatpush1.bf16.msra.mxu0 0
        %621 = vmatprep.mubr.bf16.mxu0 0
        %622 = vmatmul.mubr.bf16.gmra.mrb[0].mxu0 %v523
        %v623 = vpop.f32.mrb[0].mxu0
        %v624 = vadd.f32 %v575, %v623
        %v625 = vpop.f32.mrb[0].mxu0
        %v626 = vpop.f32.mrb[0].mxu0
        %v627 = vpop.f32.mrb[0].mxu0
        %628 = vdwg.mxu0
        %v629 = vpack.c.bf16 %v624, %v624
        %v630 = vld [vmem:[%s486] sm:$0xf]
        %v631 = vld [vmem:[%s486 + $0x4] sm:$0xf]
        %v632 = vld [vmem:[%s486 + $0x8] sm:$0xf]
        %v633 = vld [vmem:[%s486 + $0xc] sm:$0xf]
        %v634 = vld [vmem:[%s489] sm:$0x1]
        %v636 = vlaneseq
        %v637 = vshrl.u32 %v636, 7
        %v638 = vsub.s32 0, %v637
        %v639 = vrot.slane %v634, %v638
        %v645 = vunpack.c.l.b16 %v630
        %v646 = vunpack.c.l.b16 %v631
        %v647 = vunpack.c.l.b16 %v632
        %v648 = vunpack.c.l.b16 %v633
        %v649 = vpack.c.b16 %v646, %v645
        %v650 = vpack.c.b16 %v648, %v647
        %653 = vmatprep.subr.bf16.mxu0 0
        %654 = vmatpush1.bf16.msra.mxu0 %v649
        %655 = vmatprep.subr.bf16.mxu0 0
        %656 = vmatpush1.bf16.msra.mxu0 %v650
        %657 = vmatprep.subr.bf16.mxu0 0
        %658 = vmatpush1.bf16.msra.mxu0 0
        %659 = vmatprep.subr.bf16.mxu0 0
        %660 = vmatpush1.bf16.msra.mxu0 0
        %661 = vmatprep.subr.bf16.mxu0 0
        %662 = vmatpush1.bf16.msra.mxu0 0
        %663 = vmatprep.subr.bf16.mxu0 0
        %664 = vmatpush1.bf16.msra.mxu0 0
        %665 = vmatprep.subr.bf16.mxu0 0
        %666 = vmatpush1.bf16.msra.mxu0 0
        %667 = vmatprep.subr.bf16.mxu0 0
        %668 = vmatpush1.bf16.msra.mxu0 0
        %669 = vmatprep.subr.bf16.mxu0 0
        %670 = vmatpush1.bf16.msra.mxu0 0
        %671 = vmatprep.subr.bf16.mxu0 0
        %672 = vmatpush1.bf16.msra.mxu0 0
        %673 = vmatprep.subr.bf16.mxu0 0
        %674 = vmatpush1.bf16.msra.mxu0 0
        %675 = vmatprep.subr.bf16.mxu0 0
        %676 = vmatpush1.bf16.msra.mxu0 0
        %677 = vmatprep.subr.bf16.mxu0 0
        %678 = vmatpush1.bf16.msra.mxu0 0
        %679 = vmatprep.subr.bf16.mxu0 0
        %680 = vmatpush1.bf16.msra.mxu0 0
        %681 = vmatprep.subr.bf16.mxu0 0
        %682 = vmatpush1.bf16.msra.mxu0 0
        %683 = vmatprep.subr.bf16.mxu0 0
        %684 = vmatpush1.bf16.msra.mxu0 0
        %685 = vmatprep.mubr.bf16.mxu0 0
        %686 = vmatmul.mubr.bf16.gmra.mrb[0].mxu0 %v523
        %v687 = vpop.f32.mrb[0].mxu0
        %v688 = vadd.f32 %v639, %v687
        %v689 = vpop.f32.mrb[0].mxu0
        %v690 = vpop.f32.mrb[0].mxu0
        %v691 = vpop.f32.mrb[0].mxu0
        %692 = vdwg.mxu0
        %v693 = vpack.c.bf16 %v688, %v688
        %vm694 = vcmask 64512
        %v696 = vsel %vm694, %v565, 0
        %v699 = vsel %vm694, %v629, 0
        %701 = vmatprep.subr.bf16.mxu0 0
        %702 = vmatpush1.bf16.xpose.msra.mxu0 %v699
        %703 = vmatprep.subr.bf16.mxu0 0
        %704 = vmatpush1.bf16.xpose.msra.mxu0 0
        %705 = vmatprep.subr.bf16.mxu0 0
        %706 = vmatpush1.bf16.xpose.msra.mxu0 0
        %707 = vmatprep.subr.bf16.mxu0 0
        %708 = vmatpush1.bf16.xpose.msra.mxu0 0
        %709 = vmatprep.subr.bf16.mxu0 0
        %710 = vmatpush1.bf16.xpose.msra.mxu0 0
        %711 = vmatprep.subr.bf16.mxu0 0
        %712 = vmatpush1.bf16.xpose.msra.mxu0 0
        %713 = vmatprep.subr.bf16.mxu0 0
        %714 = vmatpush1.bf16.xpose.msra.mxu0 0
        %715 = vmatprep.subr.bf16.mxu0 0
        %716 = vmatpush1.bf16.xpose.msra.mxu0 0
        %717 = vmatprep.subr.bf16.mxu0 0
        %718 = vmatpush1.bf16.xpose.msra.mxu0 0
        %719 = vmatprep.subr.bf16.mxu0 0
        %720 = vmatpush1.bf16.xpose.msra.mxu0 0
        %721 = vmatprep.subr.bf16.mxu0 0
        %722 = vmatpush1.bf16.xpose.msra.mxu0 0
        %723 = vmatprep.subr.bf16.mxu0 0
        %724 = vmatpush1.bf16.xpose.msra.mxu0 0
        %725 = vmatprep.subr.bf16.mxu0 0
        %726 = vmatpush1.bf16.xpose.msra.mxu0 0
        %727 = vmatprep.subr.bf16.mxu0 0
        %728 = vmatpush1.bf16.xpose.msra.mxu0 0
        %729 = vmatprep.subr.bf16.mxu0 0
        %730 = vmatpush1.bf16.xpose.msra.mxu0 0
        %731 = vmatprep.subr.bf16.mxu0 0
        %732 = vmatpush1.bf16.xpose.msra.mxu0 0
        %733 = vmatprep.mubr.bf16.mxu0 0
        %734 = vmatmul.mubr.bf16.gmra.mrb[0].mxu0 %v696
        %v735 = vpop.f32.mrb[0].mxu0
        %v736 = vadd.f32 0.0, %v735
        %v737 = vpop.f32.mrb[0].mxu0
        %v738 = vpop.f32.mrb[0].mxu0
        %v739 = vpop.f32.mrb[0].mxu0
        %740 = vdwg.mxu0
        %v741 = vsel %vm694, %v736, -inf
        %742 = vmax.xlane.f32.xlu0 %v741
        %v743 = vpop.xlane.xlu0 %742
        %v744 = vsub.f32 %v736, %v743
        %v745 = vmul.f32 %v744, 1.442695
        %v746 = vpow.pop %v745
        %v747 = vsel %vm694, %v746, 0.0
        %748 = vadd.xlane.f32.xlu0 %v747
        %v749 = vpop.xlane.xlu0 %748
        %v750 = vrcp.pop %v749
        %v751 = vmul.f32 %v746, %v750
        %v752 = vpack.c.bf16 %v751, %v751
        %v754 = vsel %vm694, %v752, 0
        %vm756 = vcmask 1043456
        %v758 = vsel %vm756, %v693, 0
        %760 = vmatprep.subr.bf16.mxu0 0
        %761 = vmatpush1.bf16.msra.mxu0 %v758
        %762 = vmatprep.subr.bf16.mxu0 0
        %763 = vmatpush1.bf16.msra.mxu0 0
        %764 = vmatprep.subr.bf16.mxu0 0
        %765 = vmatpush1.bf16.msra.mxu0 0
        %766 = vmatprep.subr.bf16.mxu0 0
        %767 = vmatpush1.bf16.msra.mxu0 0
        %768 = vmatprep.subr.bf16.mxu0 0
        %769 = vmatpush1.bf16.msra.mxu0 0
        %770 = vmatprep.subr.bf16.mxu0 0
        %771 = vmatpush1.bf16.msra.mxu0 0
        %772 = vmatprep.subr.bf16.mxu0 0
        %773 = vmatpush1.bf16.msra.mxu0 0
        %774 = vmatprep.subr.bf16.mxu0 0
        %775 = vmatpush1.bf16.msra.mxu0 0
        %776 = vmatprep.subr.bf16.mxu0 0
        %777 = vmatpush1.bf16.msra.mxu0 0
        %778 = vmatprep.subr.bf16.mxu0 0
        %779 = vmatpush1.bf16.msra.mxu0 0
        %780 = vmatprep.subr.bf16.mxu0 0
        %781 = vmatpush1.bf16.msra.mxu0 0
        %782 = vmatprep.subr.bf16.mxu0 0
        %783 = vmatpush1.bf16.msra.mxu0 0
        %784 = vmatprep.subr.bf16.mxu0 0
        %785 = vmatpush1.bf16.msra.mxu0 0
        %786 = vmatprep.subr.bf16.mxu0 0
        %787 = vmatpush1.bf16.msra.mxu0 0
        %788 = vmatprep.subr.bf16.mxu0 0
        %789 = vmatpush1.bf16.msra.mxu0 0
        %790 = vmatprep.subr.bf16.mxu0 0
        %791 = vmatpush1.bf16.msra.mxu0 0
        %792 = vmatprep.mubr.bf16.mxu0 0
        %793 = vmatmul.mubr.bf16.gmra.mrb[0].mxu0 %v754
        %v794 = vpop.f32.mrb[0].mxu0
        %v795 = vadd.f32 0.0, %v794
        %v796 = vpop.f32.mrb[0].mxu0
        %v797 = vpop.f32.mrb[0].mxu0
        %v798 = vpop.f32.mrb[0].mxu0
        %799 = vdwg.mxu0
        %801 = vrot.lane.b32.xlu0 %v565, 120
        %v802 = vpop.permute.xlu0 %801
        %804 = vrot.lane.b32.xlu0 %v629, 120
        %v805 = vpop.permute.xlu0 %804
        %v807 = vsel %vm694, %v802, 0
        %v810 = vsel %vm694, %v805, 0
        %812 = vmatprep.subr.bf16.mxu0 0
        %813 = vmatpush1.bf16.xpose.msra.mxu0 %v810
        %814 = vmatprep.subr.bf16.mxu0 0
        %815 = vmatpush1.bf16.xpose.msra.mxu0 0
        %816 = vmatprep.subr.bf16.mxu0 0
        %817 = vmatpush1.bf16.xpose.msra.mxu0 0
        %818 = vmatprep.subr.bf16.mxu0 0
        %819 = vmatpush1.bf16.xpose.msra.mxu0 0
        %820 = vmatprep.subr.bf16.mxu0 0
        %821 = vmatpush1.bf16.xpose.msra.mxu0 0
        %822 = vmatprep.subr.bf16.mxu0 0
        %823 = vmatpush1.bf16.xpose.msra.mxu0 0
        %824 = vmatprep.subr.bf16.mxu0 0
        %825 = vmatpush1.bf16.xpose.msra.mxu0 0
        %826 = vmatprep.subr.bf16.mxu0 0
        %827 = vmatpush1.bf16.xpose.msra.mxu0 0
        %828 = vmatprep.subr.bf16.mxu0 0
        %829 = vmatpush1.bf16.xpose.msra.mxu0 0
        %830 = vmatprep.subr.bf16.mxu0 0
        %831 = vmatpush1.bf16.xpose.msra.mxu0 0
        %832 = vmatprep.subr.bf16.mxu0 0
        %833 = vmatpush1.bf16.xpose.msra.mxu0 0
        %834 = vmatprep.subr.bf16.mxu0 0
        %835 = vmatpush1.bf16.xpose.msra.mxu0 0
        %836 = vmatprep.subr.bf16.mxu0 0
        %837 = vmatpush1.bf16.xpose.msra.mxu0 0
        %838 = vmatprep.subr.bf16.mxu0 0
        %839 = vmatpush1.bf16.xpose.msra.mxu0 0
        %840 = vmatprep.subr.bf16.mxu0 0
        %841 = vmatpush1.bf16.xpose.msra.mxu0 0
        %842 = vmatprep.subr.bf16.mxu0 0
        %843 = vmatpush1.bf16.xpose.msra.mxu0 0
        %844 = vmatprep.mubr.bf16.mxu0 0
        %845 = vmatmul.mubr.bf16.gmra.mrb[0].mxu0 %v807
        %v846 = vpop.f32.mrb[0].mxu0
        %v847 = vadd.f32 0.0, %v846
        %v848 = vpop.f32.mrb[0].mxu0
        %v849 = vpop.f32.mrb[0].mxu0
        %v850 = vpop.f32.mrb[0].mxu0
        %851 = vdwg.mxu0
        %v852 = vsel %vm694, %v847, -inf
        %853 = vmax.xlane.f32.xlu0 %v852
        %v854 = vpop.xlane.xlu0 %853
        %v855 = vsub.f32 %v847, %v854
        %v856 = vmul.f32 %v855, 1.442695
        %v857 = vpow.pop %v856
        %v858 = vsel %vm694, %v857, 0.0
        %859 = vadd.xlane.f32.xlu0 %v858
        %v860 = vpop.xlane.xlu0 %859
        %v861 = vrcp.pop %v860
        %v862 = vmul.f32 %v857, %v861
        %v863 = vpack.c.bf16 %v862, %v862
        %865 = vrot.lane.b32.xlu0 %v693, 120
        %v866 = vpop.permute.xlu0 %865
        %v868 = vsel %vm694, %v863, 0
        %v871 = vsel %vm756, %v866, 0
        %873 = vmatprep.subr.bf16.mxu0 0
        %874 = vmatpush1.bf16.msra.mxu0 %v871
        %875 = vmatprep.subr.bf16.mxu0 0
        %876 = vmatpush1.bf16.msra.mxu0 0
        %877 = vmatprep.subr.bf16.mxu0 0
        %878 = vmatpush1.bf16.msra.mxu0 0
        %879 = vmatprep.subr.bf16.mxu0 0
        %880 = vmatpush1.bf16.msra.mxu0 0
        %881 = vmatprep.subr.bf16.mxu0 0
        %882 = vmatpush1.bf16.msra.mxu0 0
        %883 = vmatprep.subr.bf16.mxu0 0
        %884 = vmatpush1.bf16.msra.mxu0 0
        %885 = vmatprep.subr.bf16.mxu0 0
        %886 = vmatpush1.bf16.msra.mxu0 0
        %887 = vmatprep.subr.bf16.mxu0 0
        %888 = vmatpush1.bf16.msra.mxu0 0
        %889 = vmatprep.subr.bf16.mxu0 0
        %890 = vmatpush1.bf16.msra.mxu0 0
        %891 = vmatprep.subr.bf16.mxu0 0
        %892 = vmatpush1.bf16.msra.mxu0 0
        %893 = vmatprep.subr.bf16.mxu0 0
        %894 = vmatpush1.bf16.msra.mxu0 0
        %895 = vmatprep.subr.bf16.mxu0 0
        %896 = vmatpush1.bf16.msra.mxu0 0
        %897 = vmatprep.subr.bf16.mxu0 0
        %898 = vmatpush1.bf16.msra.mxu0 0
        %899 = vmatprep.subr.bf16.mxu0 0
        %900 = vmatpush1.bf16.msra.mxu0 0
        %901 = vmatprep.subr.bf16.mxu0 0
        %902 = vmatpush1.bf16.msra.mxu0 0
        %903 = vmatprep.subr.bf16.mxu0 0
        %904 = vmatpush1.bf16.msra.mxu0 0
        %905 = vmatprep.mubr.bf16.mxu0 0
        %906 = vmatmul.mubr.bf16.gmra.mrb[0].mxu0 %v868
        %v907 = vpop.f32.mrb[0].mxu0
        %v908 = vadd.f32 0.0, %v907
        %v909 = vpop.f32.mrb[0].mxu0
        %v910 = vpop.f32.mrb[0].mxu0
        %v911 = vpop.f32.mrb[0].mxu0
        %912 = vdwg.mxu0
        %913 = vrot.lane.b32.xlu0 %v565, 112
        %v914 = vpop.permute.xlu0 %913
        %915 = vrot.lane.b32.xlu0 %v629, 112
        %v916 = vpop.permute.xlu0 %915
        %v918 = vsel %vm694, %v914, 0
        %v921 = vsel %vm694, %v916, 0
        %923 = vmatprep.subr.bf16.mxu0 0
        %924 = vmatpush1.bf16.xpose.msra.mxu0 %v921
        %925 = vmatprep.subr.bf16.mxu0 0
        %926 = vmatpush1.bf16.xpose.msra.mxu0 0
        %927 = vmatprep.subr.bf16.mxu0 0
        %928 = vmatpush1.bf16.xpose.msra.mxu0 0
        %929 = vmatprep.subr.bf16.mxu0 0
        %930 = vmatpush1.bf16.xpose.msra.mxu0 0
        %931 = vmatprep.subr.bf16.mxu0 0
        %932 = vmatpush1.bf16.xpose.msra.mxu0 0
        %933 = vmatprep.subr.bf16.mxu0 0
        %934 = vmatpush1.bf16.xpose.msra.mxu0 0
        %935 = vmatprep.subr.bf16.mxu0 0
        %936 = vmatpush1.bf16.xpose.msra.mxu0 0
        %937 = vmatprep.subr.bf16.mxu0 0
        %938 = vmatpush1.bf16.xpose.msra.mxu0 0
        %939 = vmatprep.subr.bf16.mxu0 0
        %940 = vmatpush1.bf16.xpose.msra.mxu0 0
        %941 = vmatprep.subr.bf16.mxu0 0
        %942 = vmatpush1.bf16.xpose.msra.mxu0 0
        %943 = vmatprep.subr.bf16.mxu0 0
        %944 = vmatpush1.bf16.xpose.msra.mxu0 0
        %945 = vmatprep.subr.bf16.mxu0 0
        %946 = vmatpush1.bf16.xpose.msra.mxu0 0
        %947 = vmatprep.subr.bf16.mxu0 0
        %948 = vmatpush1.bf16.xpose.msra.mxu0 0
        %949 = vmatprep.subr.bf16.mxu0 0
        %950 = vmatpush1.bf16.xpose.msra.mxu0 0
        %951 = vmatprep.subr.bf16.mxu0 0
        %952 = vmatpush1.bf16.xpose.msra.mxu0 0
        %953 = vmatprep.subr.bf16.mxu0 0
        %954 = vmatpush1.bf16.xpose.msra.mxu0 0
        %955 = vmatprep.mubr.bf16.mxu0 0
        %956 = vmatmul.mubr.bf16.gmra.mrb[0].mxu0 %v918
        %v957 = vpop.f32.mrb[0].mxu0
        %v958 = vadd.f32 0.0, %v957
        %v959 = vpop.f32.mrb[0].mxu0
        %v960 = vpop.f32.mrb[0].mxu0
        %v961 = vpop.f32.mrb[0].mxu0
        %962 = vdwg.mxu0
        %v963 = vsel %vm694, %v958, -inf
        %964 = vmax.xlane.f32.xlu0 %v963
        %v965 = vpop.xlane.xlu0 %964
        %v966 = vsub.f32 %v958, %v965
        %v967 = vmul.f32 %v966, 1.442695
        %v968 = vpow.pop %v967
        %v969 = vsel %vm694, %v968, 0.0
        %970 = vadd.xlane.f32.xlu0 %v969
        %v971 = vpop.xlane.xlu0 %970
        %v972 = vrcp.pop %v971
        %v973 = vmul.f32 %v968, %v972
        %v974 = vpack.c.bf16 %v973, %v973
        %975 = vrot.lane.b32.xlu0 %v693, 112
        %v976 = vpop.permute.xlu0 %975
        %v978 = vsel %vm694, %v974, 0
        %v981 = vsel %vm756, %v976, 0
        %983 = vmatprep.subr.bf16.mxu0 0
        %984 = vmatpush1.bf16.msra.mxu0 %v981
        %985 = vmatprep.subr.bf16.mxu0 0
        %986 = vmatpush1.bf16.msra.mxu0 0
        %987 = vmatprep.subr.bf16.mxu0 0
        %988 = vmatpush1.bf16.msra.mxu0 0
        %989 = vmatprep.subr.bf16.mxu0 0
        %990 = vmatpush1.bf16.msra.mxu0 0
        %991 = vmatprep.subr.bf16.mxu0 0
        %992 = vmatpush1.bf16.msra.mxu0 0
        %993 = vmatprep.subr.bf16.mxu0 0
        %994 = vmatpush1.bf16.msra.mxu0 0
        %995 = vmatprep.subr.bf16.mxu0 0
        %996 = vmatpush1.bf16.msra.mxu0 0
        %997 = vmatprep.subr.bf16.mxu0 0
        %998 = vmatpush1.bf16.msra.mxu0 0
        %999 = vmatprep.subr.bf16.mxu0 0
        %1000 = vmatpush1.bf16.msra.mxu0 0
        %1001 = vmatprep.subr.bf16.mxu0 0
        %1002 = vmatpush1.bf16.msra.mxu0 0
        %1003 = vmatprep.subr.bf16.mxu0 0
        %1004 = vmatpush1.bf16.msra.mxu0 0
        %1005 = vmatprep.subr.bf16.mxu0 0
        %1006 = vmatpush1.bf16.msra.mxu0 0
        %1007 = vmatprep.subr.bf16.mxu0 0
        %1008 = vmatpush1.bf16.msra.mxu0 0
        %1009 = vmatprep.subr.bf16.mxu0 0
        %1010 = vmatpush1.bf16.msra.mxu0 0
        %1011 = vmatprep.subr.bf16.mxu0 0
        %1012 = vmatpush1.bf16.msra.mxu0 0
        %1013 = vmatprep.subr.bf16.mxu0 0
        %1014 = vmatpush1.bf16.msra.mxu0 0
        %1015 = vmatprep.mubr.bf16.mxu0 0
        %1016 = vmatmul.mubr.bf16.gmra.mrb[0].mxu0 %v978
        %v1017 = vpop.f32.mrb[0].mxu0
        %v1018 = vadd.f32 0.0, %v1017
        %v1019 = vpop.f32.mrb[0].mxu0
        %v1020 = vpop.f32.mrb[0].mxu0
        %v1021 = vpop.f32.mrb[0].mxu0
        %1022 = vdwg.mxu0
        %1023 = vrot.lane.b32.xlu0 %v565, 104
        %v1024 = vpop.permute.xlu0 %1023
        %1025 = vrot.lane.b32.xlu0 %v629, 104
        %v1026 = vpop.permute.xlu0 %1025
        %v1028 = vsel %vm694, %v1024, 0
        %v1031 = vsel %vm694, %v1026, 0
        %1033 = vmatprep.subr.bf16.mxu0 0
        %1034 = vmatpush1.bf16.xpose.msra.mxu0 %v1031
        %1035 = vmatprep.subr.bf16.mxu0 0
        %1036 = vmatpush1.bf16.xpose.msra.mxu0 0
        %1037 = vmatprep.subr.bf16.mxu0 0
        %1038 = vmatpush1.bf16.xpose.msra.mxu0 0
        %1039 = vmatprep.subr.bf16.mxu0 0
        %1040 = vmatpush1.bf16.xpose.msra.mxu0 0
        %1041 = vmatprep.subr.bf16.mxu0 0
        %1042 = vmatpush1.bf16.xpose.msra.mxu0 0
        %1043 = vmatprep.subr.bf16.mxu0 0
        %1044 = vmatpush1.bf16.xpose.msra.mxu0 0
        %1045 = vmatprep.subr.bf16.mxu0 0
        %1046 = vmatpush1.bf16.xpose.msra.mxu0 0
        %1047 = vmatprep.subr.bf16.mxu0 0
        %1048 = vmatpush1.bf16.xpose.msra.mxu0 0
        %1049 = vmatprep.subr.bf16.mxu0 0
        %1050 = vmatpush1.bf16.xpose.msra.mxu0 0
        %1051 = vmatprep.subr.bf16.mxu0 0
        %1052 = vmatpush1.bf16.xpose.msra.mxu0 0
        %1053 = vmatprep.subr.bf16.mxu0 0
        %1054 = vmatpush1.bf16.xpose.msra.mxu0 0
        %1055 = vmatprep.subr.bf16.mxu0 0
        %1056 = vmatpush1.bf16.xpose.msra.mxu0 0
        %1057 = vmatprep.subr.bf16.mxu0 0
        %1058 = vmatpush1.bf16.xpose.msra.mxu0 0
        %1059 = vmatprep.subr.bf16.mxu0 0
        %1060 = vmatpush1.bf16.xpose.msra.mxu0 0
        %1061 = vmatprep.subr.bf16.mxu0 0
        %1062 = vmatpush1.bf16.xpose.msra.mxu0 0
        %1063 = vmatprep.subr.bf16.mxu0 0
        %1064 = vmatpush1.bf16.xpose.msra.mxu0 0
        %1065 = vmatprep.mubr.bf16.mxu0 0
        %1066 = vmatmul.mubr.bf16.gmra.mrb[0].mxu0 %v1028
        %v1067 = vpop.f32.mrb[0].mxu0
        %v1068 = vadd.f32 0.0, %v1067
        %v1069 = vpop.f32.mrb[0].mxu0
        %v1070 = vpop.f32.mrb[0].mxu0
        %v1071 = vpop.f32.mrb[0].mxu0
        %1072 = vdwg.mxu0
        %v1073 = vsel %vm694, %v1068, -inf
        %1074 = vmax.xlane.f32.xlu0 %v1073
        %v1075 = vpop.xlane.xlu0 %1074
        %v1076 = vsub.f32 %v1068, %v1075
        %v1077 = vmul.f32 %v1076, 1.442695
        %v1078 = vpow.pop %v1077
        %v1079 = vsel %vm694, %v1078, 0.0
        %1080 = vadd.xlane.f32.xlu0 %v1079
        %v1081 = vpop.xlane.xlu0 %1080
        %v1082 = vrcp.pop %v1081
        %v1083 = vmul.f32 %v1078, %v1082
        %v1084 = vpack.c.bf16 %v1083, %v1083
        %1085 = vrot.lane.b32.xlu0 %v693, 104
        %v1086 = vpop.permute.xlu0 %1085
        %v1088 = vsel %vm694, %v1084, 0
        %v1091 = vsel %vm756, %v1086, 0
        %1093 = vmatprep.subr.bf16.mxu0 0
        %1094 = vmatpush1.bf16.msra.mxu0 %v1091
        %1095 = vmatprep.subr.bf16.mxu0 0
        %1096 = vmatpush1.bf16.msra.mxu0 0
        %1097 = vmatprep.subr.bf16.mxu0 0
        %1098 = vmatpush1.bf16.msra.mxu0 0
        %1099 = vmatprep.subr.bf16.mxu0 0
        %1100 = vmatpush1.bf16.msra.mxu0 0
        %1101 = vmatprep.subr.bf16.mxu0 0
        %1102 = vmatpush1.bf16.msra.mxu0 0
        %1103 = vmatprep.subr.bf16.mxu0 0
        %1104 = vmatpush1.bf16.msra.mxu0 0
        %1105 = vmatprep.subr.bf16.mxu0 0
        %1106 = vmatpush1.bf16.msra.mxu0 0
        %1107 = vmatprep.subr.bf16.mxu0 0
        %1108 = vmatpush1.bf16.msra.mxu0 0
        %1109 = vmatprep.subr.bf16.mxu0 0
        %1110 = vmatpush1.bf16.msra.mxu0 0
        %1111 = vmatprep.subr.bf16.mxu0 0
        %1112 = vmatpush1.bf16.msra.mxu0 0
        %1113 = vmatprep.subr.bf16.mxu0 0
        %1114 = vmatpush1.bf16.msra.mxu0 0
        %1115 = vmatprep.subr.bf16.mxu0 0
        %1116 = vmatpush1.bf16.msra.mxu0 0
        %1117 = vmatprep.subr.bf16.mxu0 0
        %1118 = vmatpush1.bf16.msra.mxu0 0
        %1119 = vmatprep.subr.bf16.mxu0 0
        %1120 = vmatpush1.bf16.msra.mxu0 0
        %1121 = vmatprep.subr.bf16.mxu0 0
        %1122 = vmatpush1.bf16.msra.mxu0 0
        %1123 = vmatprep.subr.bf16.mxu0 0
        %1124 = vmatpush1.bf16.msra.mxu0 0
        %1125 = vmatprep.mubr.bf16.mxu0 0
        %1126 = vmatmul.mubr.bf16.gmra.mrb[0].mxu0 %v1088
        %v1127 = vpop.f32.mrb[0].mxu0
        %v1128 = vadd.f32 0.0, %v1127
        %v1129 = vpop.f32.mrb[0].mxu0
        %v1130 = vpop.f32.mrb[0].mxu0
        %v1131 = vpop.f32.mrb[0].mxu0
        %1132 = vdwg.mxu0
        %1134 = vrot.lane.b32.xlu0 %v908, 8
        %v1135 = vpop.permute.xlu0 %1134
        %1138 = vrot.lane.b32.xlu0 %v1018, 16
        %v1139 = vpop.permute.xlu0 %1138
        %1142 = vrot.lane.b32.xlu0 %v1128, 24
        %v1143 = vpop.permute.xlu0 %1142
        %v1145 = vsel %vm694, %v795, %v1135
        %vm1146 = vcmask 130048
        %v1147 = vsel %vm1146, %v1145, %v1139
        %vm1148 = vcmask 195584
        %v1149 = vsel %vm1148, %v1147, %v1143
        %v1150 = vpack.c.bf16 %v1149, %v1149
        %v1151 = vld [vmem:[#allocation2] sm:$0xff]
        %v1152 = vld [vmem:[#allocation9] sm:$0xf]
        %v1153 = vld [vmem:[#allocation9 + $0x4] sm:$0xf]
        %v1154 = vld [vmem:[#allocation9 + $0x8] sm:$0xf]
        %v1155 = vld [vmem:[#allocation9 + $0xc] sm:$0xf]
        %v1160 = vunpack.c.l.b16 %v1152
        %v1161 = vunpack.c.l.b16 %v1153
        %v1162 = vunpack.c.l.b16 %v1154
        %v1163 = vunpack.c.l.b16 %v1155
        %v1164 = vpack.c.b16 %v1161, %v1160
        %v1165 = vpack.c.b16 %v1163, %v1162
        %v1169 = vsel %vm521, %v1150, 0
        %1171 = vmatprep.subr.bf16.mxu0 0
        %1172 = vmatpush1.bf16.msra.mxu0 %v1164
        %1173 = vmatprep.subr.bf16.mxu0 0
        %1174 = vmatpush1.bf16.msra.mxu0 %v1165
        %1175 = vmatprep.subr.bf16.mxu0 0
        %1176 = vmatpush1.bf16.msra.mxu0 0
        %1177 = vmatprep.subr.bf16.mxu0 0
        %1178 = vmatpush1.bf16.msra.mxu0 0
        %1179 = vmatprep.subr.bf16.mxu0 0
        %1180 = vmatpush1.bf16.msra.mxu0 0
        %1181 = vmatprep.subr.bf16.mxu0 0
        %1182 = vmatpush1.bf16.msra.mxu0 0
        %1183 = vmatprep.subr.bf16.mxu0 0
        %1184 = vmatpush1.bf16.msra.mxu0 0
        %1185 = vmatprep.subr.bf16.mxu0 0
        %1186 = vmatpush1.bf16.msra.mxu0 0
        %1187 = vmatprep.subr.bf16.mxu0 0
        %1188 = vmatpush1.bf16.msra.mxu0 0
        %1189 = vmatprep.subr.bf16.mxu0 0
        %1190 = vmatpush1.bf16.msra.mxu0 0
        %1191 = vmatprep.subr.bf16.mxu0 0
        %1192 = vmatpush1.bf16.msra.mxu0 0
        %1193 = vmatprep.subr.bf16.mxu0 0
        %1194 = vmatpush1.bf16.msra.mxu0 0
        %1195 = vmatprep.subr.bf16.mxu0 0
        %1196 = vmatpush1.bf16.msra.mxu0 0
        %1197 = vmatprep.subr.bf16.mxu0 0
        %1198 = vmatpush1.bf16.msra.mxu0 0
        %1199 = vmatprep.subr.bf16.mxu0 0
        %1200 = vmatpush1.bf16.msra.mxu0 0
        %1201 = vmatprep.subr.bf16.mxu0 0
        %1202 = vmatpush1.bf16.msra.mxu0 0
        %1203 = vmatprep.mubr.bf16.mxu0 0
        %1204 = vmatmul.mubr.bf16.gmra.mrb[0].mxu0 %v1169
        %v1205 = vpop.f32.mrb[0].mxu0
        %v1206 = vadd.f32 0.0, %v1205
        %v1207 = vpop.f32.mrb[0].mxu0
        %v1208 = vpop.f32.mrb[0].mxu0
        %v1209 = vpop.f32.mrb[0].mxu0
        %1210 = vdwg.mxu0
        %v1211 = vadd.f32 %v1151, %v1206
        %1212 = vst.msk [vmem:[#allocation2] sm:$0xff] %vm521, %v1211
        // Predicated region
        $region77: #{tpu_custom_call.1} parent=55 // pred_check
          %p1213 = pneg %p491
        $region78: #{tpu_custom_call.1} parent=55 // pred_check_branch
          %1215 = sbr.rel (%p1213) target = $region80
        $region79: #{tpu_custom_call.1} parent=55 // pred_region
          %v1216 = vld [vmem:[#allocation2] sm:$0xff]
          %v1217 = vld [vmem:[%s8] sm:$0x1]
          %v1219 = vlaneseq
          %v1220 = vshrl.u32 %v1219, 7
          %v1221 = vsub.s32 0, %v1220
          %v1222 = vrot.slane %v1217, %v1221
          %v1224 = vadd.f32 %v1216, %v1222
          %1225 = vst.msk [vmem:[%s475] sm:$0xff] %vm521, %v1224
        $region80: #{tpu_custom_call.1} parent=55 // pred_fallthru
          _
        %s1226 = sand.u32 %s277, 1
        %s1227 = scalar_lea.sflag [#allocation5], %s1226
        %s1228 = sand.u32 %s277, 1
        %s1229 = smul.addr %s1228, 8
        %s1230 = scalar_lea.vmem [#allocation11], %s1229
        // Predicated region
        $region81: #{tpu_custom_call.1} parent=55 // pred_check
          %p1231 = pneg %p287
        $region82: #{tpu_custom_call.1} parent=55 // pred_check_branch
          %1233 = sbr.rel (%p1231) target = $region84
        $region83: #{tpu_custom_call.1} parent=55 // pred_region
          %s1235 = ssub.s32 128, 128
          %1236 = vsyncadd %s1227, %s1235
          %s1237 = smul.addr %s32, 128
          %s1238 = scalar_lea.hbm %s9, %s1237
          %s1240 = sshll.u32 %s1230, 4
          %s1241 = int_to_ptr.vmem [resolvable:$true] %s1240
          %1243 = dma.vmem_to_hbm [thread:$0]  %s1241, 128, %s1238, %s1227
        $region84: #{tpu_custom_call.1} parent=55 // pred_fallthru
          _
      $region56: #{tpu_custom_call.1} parent=5 // pred_fallthru
        _
      %p1244 = scmp.le.s32.totalorder 2, %s23
      // Predicated region
      $region85: #{tpu_custom_call.1} parent=5 // pred_check
        %p1245 = pneg %p1244
      $region86: #{tpu_custom_call.1} parent=5 // pred_check_branch
        %1247 = sbr.rel (%p1245) target = $region88
      $region87: #{tpu_custom_call.1} parent=5 // pred_region
        %s1248 = ssub.s32 %s23, 2
        // Predicated region
        $region89: #{tpu_custom_call.1} parent=87 // pred_check
          %p1249 = pneg %p293
        $region90: #{tpu_custom_call.1} parent=87 // pred_check_branch
          %1251 = sbr.rel (%p1249) target = $region92
        $region91: #{tpu_custom_call.1} parent=87 // pred_region
          %s1252 = sand.u32 %s278, 1
          %s1253 = scalar_lea.sflag [#allocation5], %s1252
          %s1254 = sand.u32 %s278, 1
          %s1255 = smul.addr %s1254, 8
          %s1256 = scalar_lea.vmem [#allocation11], %s1255
          %1257 = dma.done %s1253, 128
        $region92: #{tpu_custom_call.1} parent=87 // pred_fallthru
          _
      $region88: #{tpu_custom_call.1} parent=5 // pred_fallthru
        _
    $region6: #{tpu_custom_call.1} parent=1 // loop_footer
      %s27 = sadd.s32 1, %s23
    $region7: #{tpu_custom_call.1} parent=1 // loop_footer_branch
      %22 = sbr.rel target = $region3
    $region8: #{tpu_custom_call.1} parent=1 // loop_exit
      _
    %1258 = vsyncpa [#allocation4], 1
    %s1259 = scalar_lea.sflag [#allocation4], 1
    %1260 = vsyncpa %s1259, 1
    %1261 = vsyncpa [#allocation7], 1
    %1262 = vsyncpa [#allocation10], 1
    %1263 = vsyncpa [#allocation5], 1
    %s1264 = scalar_lea.sflag [#allocation5], 1
    %1265 = vsyncpa %s1264, 1

</llo_original>
